<compile_context>
chip_gen: v5e
topology: v5e:2x2
jax: 0.10.0
libtpu: 0.0.40
codegen_flags: <defaults>
</compile_context>

<pallas_src>
import functools
import math

import jax
import jax.numpy as jnp
from jax import lax
from jax.experimental import pallas as pl
from jax.experimental.pallas import tpu as pltpu

EPS = 6.4 / 2 ** 8          # same EPS as the reference histogram.py
SIGMA = 0.02
INV_SIGMA = 1.0 / SIGMA
H_SZ = 64                   # histogram size h
IMG_SZ = 160                # resize threshold
HIST_LO, HIST_HI = -3.0, 3.0
LOSS_WEIGHT = 1.0
MAX_TN = 2048               # pixel-tile size (multiple of 128)


def _round_up(x, m):
    return (x + m - 1) // m * m


# ---------------------------------------------------------------------------
# Fused Pallas kernel: per-image histograms (pred + target) -> Hellinger sum
# ---------------------------------------------------------------------------
def _hist_loss_kernel(xp_ref, xt_ref, o_ref, accp_ref, acct_ref, *,
                      n_valid, n_total):
    """Grid = (B, num_pixel_tiles).

    xp_ref, xt_ref : (1, 3, TN)  clamped RGB pixels (pred / target), flattened
    o_ref          : (1, 1, 1)   per-image sum((sqrt(t_hist)-sqrt(p_hist))^2)
    accp/acct_ref  : (3, 64, 64) f32 VMEM histogram accumulators
    """
    k = pl.program_id(1)
    nk = pl.num_programs(1)
    tn = xp_ref.shape[-1]

    @pl.when(k == 0)
    def _init():
        accp_ref[...] = jnp.zeros_like(accp_ref)
        acct_ref[...] = jnp.zeros_like(acct_ref)

    # Bin centers linspace(-3, 3, 64), pre-scaled by 1/sigma, built in-kernel.
    bin_idx = lax.broadcasted_iota(jnp.int32, (H_SZ, 1), 0).astype(jnp.float32)
    bins = (HIST_LO + bin_idx * ((HIST_HI - HIST_LO) / (H_SZ - 1))) * INV_SIGMA

    need_mask = (n_total != n_valid)     # static Python bool

    def accumulate(x, acc_ref):
        r = x[0:1, :]                    # (1, TN)
        g = x[1:2, :]
        b = x[2:3, :]

        # intensity scale  Iy = sqrt(r^2 + g^2 + b^2 + EPS)
        iy = jnp.sqrt(r * r + g * g + b * b + EPS)          # (1, TN)
        if need_mask:
            # Zero the weight of padded tail pixels -> they contribute nothing.
            gidx = k * tn + lax.broadcasted_iota(jnp.int32, (1, tn), 1)
            iy = jnp.where(gidx < n_valid, iy, 0.0)

        lr = jnp.log(r + EPS)
        lg = jnp.log(g + EPS)
        lb = jnp.log(b + EPS)
        # 1/sigma folded into the (1, TN) chroma differences (not the hot loop).
        u_rg = (lr - lg) * INV_SIGMA
        u_rb = (lr - lb) * INV_SIGMA
        u_gb = (lg - lb) * INV_SIGMA

        def iq(u):                       # (1, TN) -> (64, TN) inverse-quadratic
            d = u - bins
            return pl.reciprocal(1.0 + d * d, approx=True)   # EUP vrcp

        k_rg = iq(u_rg)
        k_rb = iq(u_rb)
        k_gb = iq(u_gb)

        # Only 3 kernel matrices are needed: the G/B planes are row/column
        # flips of these products (bins symmetric about 0), and flips cancel
        # in the summed Hellinger loss, so we accumulate the un-flipped planes.
        a_rg = (k_rg * iy).astype(jnp.bfloat16)   # left operand for R & G planes
        a_rb = (k_rb * iy).astype(jnp.bfloat16)   # left operand for B plane
        k_rb_b = k_rb.astype(jnp.bfloat16)
        k_gb_b = k_gb.astype(jnp.bfloat16)

        dn = (((1,), (1,)), ((), ()))             # contract pixel axis: A @ K^T
        m_r = lax.dot_general(a_rg, k_rb_b, dn, preferred_element_type=jnp.float32)
        m_g = lax.dot_general(a_rg, k_gb_b, dn, preferred_element_type=jnp.float32)
        m_b = lax.dot_general(a_rb, k_gb_b, dn, preferred_element_type=jnp.float32)

        acc_ref[0] += m_r
        acc_ref[1] += m_g
        acc_ref[2] += m_b

    accumulate(xp_ref[0], accp_ref)
    accumulate(xt_ref[0], acct_ref)

    @pl.when(k == nk - 1)
    def _finalize():
        hp = accp_ref[...]                               # (3, 64, 64) >= 0
        ht = acct_ref[...]
        inv_sp = lax.rsqrt(jnp.sum(hp) + EPS)            # sqrt(h/(S+EPS)) =
        inv_st = lax.rsqrt(jnp.sum(ht) + EPS)            #   sqrt(h)*rsqrt(S+EPS)
        d = jnp.sqrt(ht) * inv_st - jnp.sqrt(hp) * inv_sp
        o_ref[...] = jnp.sum(d * d).reshape(1, 1, 1)


# ---------------------------------------------------------------------------
# Wrappers (glue: clamp, optional 'sampling' resize, flatten, pad)
# ---------------------------------------------------------------------------
def _prep(x):
    """NCHW -> (B, 3, N) clamped float32, 'sampling' resize if > IMG_SZ."""
    x = jnp.clip(x.astype(jnp.float32), 0.0, 1.0)
    B, C, H, W = x.shape
    if H > IMG_SZ or W > IMG_SZ:
        # 'sampling' resize: pick H_SZ pixel indices per spatial dim
        inds_h = jnp.floor(jnp.linspace(0.0, H, H_SZ, endpoint=False)).astype(jnp.int32)
        inds_w = jnp.floor(jnp.linspace(0.0, W, H_SZ, endpoint=False)).astype(jnp.int32)
        x = jnp.take(x, inds_h, axis=2)
        x = jnp.take(x, inds_w, axis=3)
    # TODO(synk): resizing='interpolation' (bilinear) mode not implemented;
    # the configured mode for this loss is 'sampling'.
    if x.shape[1] > 3:
        x = x[:, :3]
    B, _, Hs, Ws = x.shape
    return x.reshape(B, 3, Hs * Ws)


def histogram_loss(pred, target, loss_weight=LOSS_WEIGHT):
    xp = _prep(pred)
    xt = _prep(target)
    B, _, N = xp.shape

    tn = min(MAX_TN, _round_up(N, 128))
    n_pad = _round_up(N, tn)
    if n_pad != N:
        pad = n_pad - N
        xp = jnp.pad(xp, ((0, 0), (0, 0), (0, pad)))
        xt = jnp.pad(xt, ((0, 0), (0, 0), (0, pad)))
    nt = n_pad // tn

    kernel = functools.partial(_hist_loss_kernel, n_valid=N, n_total=n_pad)

    partials = pl.pallas_call(
        kernel,
        out_shape=jax.ShapeDtypeStruct((B, 1, 1), jnp.float32),
        grid=(B, nt),
        in_specs=[
            pl.BlockSpec((1, 3, tn), lambda b, k: (b, 0, k)),
            pl.BlockSpec((1, 3, tn), lambda b, k: (b, 0, k)),
        ],
        out_specs=pl.BlockSpec((1, 1, 1), lambda b, k: (b, 0, 0)),
        scratch_shapes=[
            pltpu.VMEM((3, H_SZ, H_SZ), jnp.float32),
            pltpu.VMEM((3, H_SZ, H_SZ), jnp.float32),
        ],
        compiler_params=pltpu.CompilerParams(
            dimension_semantics=("parallel", "arbitrary")),
    )(xp, xt)

    s = jnp.sum(partials)
    return loss_weight * ((1.0 / math.sqrt(2.0)) * jnp.sqrt(s) / B)


# ---------------------------------------------------------------------------
# Pure-JAX reference (exact math, f32) for a sanity check
# ---------------------------------------------------------------------------
def _reference_hist(x_flat):
    B = x_flat.shape[0]
    I = x_flat                                                # (B, 3, N)
    iy = jnp.sqrt(jnp.sum(I * I, axis=1) + EPS)               # (B, N)
    l = jnp.log(I + EPS)                                      # (B, 3, N)
    bins = jnp.linspace(HIST_LO, HIST_HI, H_SZ, dtype=jnp.float32)

    def k(u):                                                 # (B, N) -> (B, N, h)
        d = u[:, :, None] - bins[None, None, :]
        return 1.0 / (1.0 + (d * d) / (SIGMA ** 2))

    pairs = [(0, 1, 2), (1, 0, 2), (2, 0, 1)]
    hists = []
    for c, a, b in pairs:
        ku = k(l[:, c] - l[:, a]) * iy[:, :, None]
        kv = k(l[:, c] - l[:, b])
        hists.append(jnp.einsum('bni,bnj->bij', ku, kv))
    h = jnp.stack(hists, axis=1)                              # (B, 3, h, h)
    tot = jnp.sum(h, axis=(1, 2, 3), keepdims=True) + EPS
    return h / tot


def _reference_loss(pred, target, loss_weight=LOSS_WEIGHT):
    ph = _reference_hist(_prep(pred))
    th = _reference_hist(_prep(target))
    d = jnp.sqrt(th) - jnp.sqrt(ph)
    return loss_weight * ((1.0 / math.sqrt(2.0)) * jnp.sqrt(jnp.sum(d * d)) / ph.shape[0])


# ---------------------------------------------------------------------------
if __name__ == "__main__":
    key = jax.random.PRNGKey(0)
    k1, k2, k3, k4 = jax.random.split(key, 4)

    # Small primary test (single pixel tile).
    pred = jax.random.uniform(k1, (2, 3, 16, 16), dtype=jnp.float32)
    target = jax.random.uniform(k2, (2, 3, 16, 16), dtype=jnp.float32)
    loss = jax.block_until_ready(histogram_loss(pred, target))
    ref = _reference_loss(pred, target)
    assert jnp.isfinite(loss)
    assert jnp.allclose(loss, ref, rtol=5e-2, atol=5e-3), (float(loss), float(ref))

    # Second test exercising multi-tile pixel axis + tail masking (N=7680).
    pred2 = jax.random.uniform(k3, (1, 3, 96, 80), dtype=jnp.float32)
    target2 = jax.random.uniform(k4, (1, 3, 96, 80), dtype=jnp.float32)
    loss2 = jax.block_until_ready(histogram_loss(pred2, target2))
    ref2 = _reference_loss(pred2, target2)
    assert jnp.isfinite(loss2)
    assert jnp.allclose(loss2, ref2, rtol=5e-2, atol=5e-3), (float(loss2), float(ref2))

    print("KERNEL_OK")
</pallas_src>

<mosaic_0001>
module attributes {stable_mosaic.version = 11 : i64} {
  func.func @_hist_loss_kernel(%arg0: i32, %arg1: i32, %arg2: memref<1x3x256xf32, #tpu.memory_space<vmem>>, %arg3: memref<1x3x256xf32, #tpu.memory_space<vmem>>, %arg4: memref<1x1x1xf32, #tpu.memory_space<vmem>>, %arg5: memref<3x64x64xf32, #tpu.memory_space<vmem>>, %arg6: memref<3x64x64xf32, #tpu.memory_space<vmem>>) attributes {dimension_semantics = [#tpu.dimension_semantics<parallel>, #tpu.dimension_semantics<arbitrary>], iteration_bounds = array<i64: 2, 1>, scalar_prefetch = 0 : i64, scratch_operands = 2 : i64, tpu.core_type = #tpu.core_type<tc>, window_params = [{transform_indices = @transform_0, window_bounds = array<i64: 1, 3, 256>}, {transform_indices = @transform_1, window_bounds = array<i64: 1, 3, 256>}, {transform_indices = @transform_2, window_bounds = array<i64: 1, 1, 1>}]} {
    %c0_i32 = arith.constant 0 : i32
    %0 = arith.cmpi eq, %arg1, %c0_i32 : i32
    %1 = arith.extui %0 : i1 to i32
    %c0_i32_0 = arith.constant 0 : i32
    %2 = arith.cmpi ne, %1, %c0_i32_0 : i32
    scf.if %2 {
      %cst_70 = arith.constant 0.000000e+00 : f32
      %176 = vector.broadcast %cst_70 : f32 to vector<3x64x64xf32>
      %c0_71 = arith.constant 0 : index
      %c0_72 = arith.constant 0 : index
      %c0_73 = arith.constant 0 : index
      %177 = vector.load %arg5[%c0_71, %c0_72, %c0_73] : memref<3x64x64xf32, #tpu.memory_space<vmem>>, vector<3x64x64xf32>
      tpu.vector_store %arg5[%c0_71, %c0_72, %c0_73], %176 {strides = array<i32>} : memref<3x64x64xf32, #tpu.memory_space<vmem>>, vector<3x64x64xf32>,
      %cst_74 = arith.constant 0.000000e+00 : f32
      %178 = vector.broadcast %cst_74 : f32 to vector<3x64x64xf32>
      %c0_75 = arith.constant 0 : index
      %c0_76 = arith.constant 0 : index
      %c0_77 = arith.constant 0 : index
      %179 = vector.load %arg6[%c0_75, %c0_76, %c0_77] : memref<3x64x64xf32, #tpu.memory_space<vmem>>, vector<3x64x64xf32>
      tpu.vector_store %arg6[%c0_75, %c0_76, %c0_77], %178 {strides = array<i32>} : memref<3x64x64xf32, #tpu.memory_space<vmem>>, vector<3x64x64xf32>,
    } else {
    }
    %3 = tpu.iota {dimensions = array<i32: 0>} : vector<64x1xi32>
    %4 = arith.sitofp %3 : vector<64x1xi32> to vector<64x1xf32>
    %cst = arith.constant 0.095238097 : f32
    %5 = vector.broadcast %cst : f32 to vector<64x1xf32>
    %6 = arith.mulf %4, %5 : vector<64x1xf32>
    %cst_1 = arith.constant -3.000000e+00 : f32
    %7 = vector.broadcast %cst_1 : f32 to vector<64x1xf32>
    %8 = arith.addf %7, %6 : vector<64x1xf32>
    %cst_2 = arith.constant 5.000000e+01 : f32
    %9 = vector.broadcast %cst_2 : f32 to vector<64x1xf32>
    %10 = arith.mulf %8, %9 : vector<64x1xf32>
    %c0 = arith.constant 0 : index
    %c0_3 = arith.constant 0 : index
    %c0_4 = arith.constant 0 : index
    %11 = vector.load %arg2[%c0, %c0_3, %c0_4] : memref<1x3x256xf32, #tpu.memory_space<vmem>>, vector<1x3x256xf32>
    %12 = vector.shape_cast %11 : vector<1x3x256xf32> to vector<3x256xf32>
    %13 = vector.extract_strided_slice %12 {offsets = [0, 0], sizes = [1, 256], strides = [1, 1]} : vector<3x256xf32> to vector<1x256xf32>
    %14 = vector.extract_strided_slice %12 {offsets = [1, 0], sizes = [1, 256], strides = [1, 1]} : vector<3x256xf32> to vector<1x256xf32>
    %15 = vector.extract_strided_slice %12 {offsets = [2, 0], sizes = [1, 256], strides = [1, 1]} : vector<3x256xf32> to vector<1x256xf32>
    %16 = arith.mulf %13, %13 : vector<1x256xf32>
    %17 = arith.mulf %14, %14 : vector<1x256xf32>
    %18 = arith.addf %16, %17 : vector<1x256xf32>
    %19 = arith.mulf %15, %15 : vector<1x256xf32>
    %20 = arith.addf %18, %19 : vector<1x256xf32>
    %cst_5 = arith.constant 2.500000e-02 : f32
    %21 = vector.broadcast %cst_5 : f32 to vector<1x256xf32>
    %22 = arith.addf %20, %21 : vector<1x256xf32>
    %23 = math.sqrt %22 : vector<1x256xf32>
    %cst_6 = arith.constant 2.500000e-02 : f32
    %24 = vector.broadcast %cst_6 : f32 to vector<1x256xf32>
    %25 = arith.addf %13, %24 : vector<1x256xf32>
    %26 = math.log %25 : vector<1x256xf32>
    %cst_7 = arith.constant 2.500000e-02 : f32
    %27 = vector.broadcast %cst_7 : f32 to vector<1x256xf32>
    %28 = arith.addf %14, %27 : vector<1x256xf32>
    %29 = math.log %28 : vector<1x256xf32>
    %cst_8 = arith.constant 2.500000e-02 : f32
    %30 = vector.broadcast %cst_8 : f32 to vector<1x256xf32>
    %31 = arith.addf %15, %30 : vector<1x256xf32>
    %32 = math.log %31 : vector<1x256xf32>
    %33 = arith.subf %26, %29 : vector<1x256xf32>
    %cst_9 = arith.constant 5.000000e+01 : f32
    %34 = vector.broadcast %cst_9 : f32 to vector<1x256xf32>
    %35 = arith.mulf %33, %34 : vector<1x256xf32>
    %36 = arith.subf %26, %32 : vector<1x256xf32>
    %cst_10 = arith.constant 5.000000e+01 : f32
    %37 = vector.broadcast %cst_10 : f32 to vector<1x256xf32>
    %38 = arith.mulf %36, %37 : vector<1x256xf32>
    %39 = arith.subf %29, %32 : vector<1x256xf32>
    %cst_11 = arith.constant 5.000000e+01 : f32
    %40 = vector.broadcast %cst_11 : f32 to vector<1x256xf32>
    %41 = arith.mulf %39, %40 : vector<1x256xf32>
    %42 = vector.broadcast %35 : vector<1x256xf32> to vector<64x256xf32>
    %43 = vector.broadcast %10 : vector<64x1xf32> to vector<64x256xf32>
    %44 = arith.subf %42, %43 : vector<64x256xf32>
    %45 = arith.mulf %44, %44 : vector<64x256xf32>
    %cst_12 = arith.constant 1.000000e+00 : f32
    %46 = vector.broadcast %cst_12 : f32 to vector<64x256xf32>
    %47 = arith.addf %46, %45 : vector<64x256xf32>
    %48 = tpu.reciprocal %47 {approx = true} : vector<64x256xf32> -> vector<64x256xf32>
    %49 = vector.broadcast %38 : vector<1x256xf32> to vector<64x256xf32>
    %50 = vector.broadcast %10 : vector<64x1xf32> to vector<64x256xf32>
    %51 = arith.subf %49, %50 : vector<64x256xf32>
    %52 = arith.mulf %51, %51 : vector<64x256xf32>
    %cst_13 = arith.constant 1.000000e+00 : f32
    %53 = vector.broadcast %cst_13 : f32 to vector<64x256xf32>
    %54 = arith.addf %53, %52 : vector<64x256xf32>
    %55 = tpu.reciprocal %54 {approx = true} : vector<64x256xf32> -> vector<64x256xf32>
    %56 = vector.broadcast %41 : vector<1x256xf32> to vector<64x256xf32>
    %57 = vector.broadcast %10 : vector<64x1xf32> to vector<64x256xf32>
    %58 = arith.subf %56, %57 : vector<64x256xf32>
    %59 = arith.mulf %58, %58 : vector<64x256xf32>
    %cst_14 = arith.constant 1.000000e+00 : f32
    %60 = vector.broadcast %cst_14 : f32 to vector<64x256xf32>
    %61 = arith.addf %60, %59 : vector<64x256xf32>
    %62 = tpu.reciprocal %61 {approx = true} : vector<64x256xf32> -> vector<64x256xf32>
    %63 = vector.broadcast %23 : vector<1x256xf32> to vector<64x256xf32>
    %64 = arith.mulf %48, %63 : vector<64x256xf32>
    %65 = arith.truncf %64 : vector<64x256xf32> to vector<64x256xbf16>
    %66 = vector.broadcast %23 : vector<1x256xf32> to vector<64x256xf32>
    %67 = arith.mulf %55, %66 : vector<64x256xf32>
    %68 = arith.truncf %67 : vector<64x256xf32> to vector<64x256xbf16>
    %69 = arith.truncf %55 : vector<64x256xf32> to vector<64x256xbf16>
    %70 = arith.truncf %62 : vector<64x256xf32> to vector<64x256xbf16>
    %cst_15 = arith.constant dense<0.000000e+00> : vector<64x64xf32>
    %71 = tpu.matmul %65, %69, %cst_15 {dimension_numbers = #tpu.dot_dimension_numbers<[1], [1], [0], [0], [0, 0, 1, 0], [], []>} : vector<64x256xbf16>, vector<64x256xbf16>, vector<64x64xf32> -> vector<64x64xf32>
    %cst_16 = arith.constant dense<0.000000e+00> : vector<64x64xf32>
    %72 = tpu.matmul %65, %70, %cst_16 {dimension_numbers = #tpu.dot_dimension_numbers<[1], [1], [0], [0], [0, 0, 1, 0], [], []>} : vector<64x256xbf16>, vector<64x256xbf16>, vector<64x64xf32> -> vector<64x64xf32>
    %cst_17 = arith.constant dense<0.000000e+00> : vector<64x64xf32>
    %73 = tpu.matmul %68, %70, %cst_17 {dimension_numbers = #tpu.dot_dimension_numbers<[1], [1], [0], [0], [0, 0, 1, 0], [], []>} : vector<64x256xbf16>, vector<64x256xbf16>, vector<64x64xf32> -> vector<64x64xf32>
    %c0_18 = arith.constant 0 : index
    %c0_19 = arith.constant 0 : index
    %c0_20 = arith.constant 0 : index
    %74 = vector.load %arg5[%c0_18, %c0_19, %c0_20] : memref<3x64x64xf32, #tpu.memory_space<vmem>>, vector<1x64x64xf32>
    %75 = vector.shape_cast %74 : vector<1x64x64xf32> to vector<64x64xf32>
    %76 = arith.addf %75, %71 : vector<64x64xf32>
    %c0_21 = arith.constant 0 : index
    %c0_22 = arith.constant 0 : index
    %c0_23 = arith.constant 0 : index
    %77 = vector.load %arg5[%c0_21, %c0_22, %c0_23] : memref<3x64x64xf32, #tpu.memory_space<vmem>>, vector<1x64x64xf32>
    %78 = vector.shape_cast %77 : vector<1x64x64xf32> to vector<64x64xf32>
    %79 = vector.shape_cast %76 : vector<64x64xf32> to vector<1x64x64xf32>
    tpu.vector_store %arg5[%c0_21, %c0_22, %c0_23], %79 {strides = array<i32>} : memref<3x64x64xf32, #tpu.memory_space<vmem>>, vector<1x64x64xf32>,
    %c1 = arith.constant 1 : index
    %c0_24 = arith.constant 0 : index
    %c0_25 = arith.constant 0 : index
    %80 = vector.load %arg5[%c1, %c0_24, %c0_25] : memref<3x64x64xf32, #tpu.memory_space<vmem>>, vector<1x64x64xf32>
    %81 = vector.shape_cast %80 : vector<1x64x64xf32> to vector<64x64xf32>
    %82 = arith.addf %81, %72 : vector<64x64xf32>
    %c1_26 = arith.constant 1 : index
    %c0_27 = arith.constant 0 : index
    %c0_28 = arith.constant 0 : index
    %83 = vector.load %arg5[%c1_26, %c0_27, %c0_28] : memref<3x64x64xf32, #tpu.memory_space<vmem>>, vector<1x64x64xf32>
    %84 = vector.shape_cast %83 : vector<1x64x64xf32> to vector<64x64xf32>
    %85 = vector.shape_cast %82 : vector<64x64xf32> to vector<1x64x64xf32>
    tpu.vector_store %arg5[%c1_26, %c0_27, %c0_28], %85 {strides = array<i32>} : memref<3x64x64xf32, #tpu.memory_space<vmem>>, vector<1x64x64xf32>,
    %c2 = arith.constant 2 : index
    %c0_29 = arith.constant 0 : index
    %c0_30 = arith.constant 0 : index
    %86 = vector.load %arg5[%c2, %c0_29, %c0_30] : memref<3x64x64xf32, #tpu.memory_space<vmem>>, vector<1x64x64xf32>
    %87 = vector.shape_cast %86 : vector<1x64x64xf32> to vector<64x64xf32>
    %88 = arith.addf %87, %73 : vector<64x64xf32>
    %c2_31 = arith.constant 2 : index
    %c0_32 = arith.constant 0 : index
    %c0_33 = arith.constant 0 : index
    %89 = vector.load %arg5[%c2_31, %c0_32, %c0_33] : memref<3x64x64xf32, #tpu.memory_space<vmem>>, vector<1x64x64xf32>
    %90 = vector.shape_cast %89 : vector<1x64x64xf32> to vector<64x64xf32>
    %91 = vector.shape_cast %88 : vector<64x64xf32> to vector<1x64x64xf32>
    tpu.vector_store %arg5[%c2_31, %c0_32, %c0_33], %91 {strides = array<i32>} : memref<3x64x64xf32, #tpu.memory_space<vmem>>, vector<1x64x64xf32>,
    %c0_34 = arith.constant 0 : index
    %c0_35 = arith.constant 0 : index
    %c0_36 = arith.constant 0 : index
    %92 = vector.load %arg3[%c0_34, %c0_35, %c0_36] : memref<1x3x256xf32, #tpu.memory_space<vmem>>, vector<1x3x256xf32>
    %93 = vector.shape_cast %92 : vector<1x3x256xf32> to vector<3x256xf32>
    %94 = vector.extract_strided_slice %93 {offsets = [0, 0], sizes = [1, 256], strides = [1, 1]} : vector<3x256xf32> to vector<1x256xf32>
    %95 = vector.extract_strided_slice %93 {offsets = [1, 0], sizes = [1, 256], strides = [1, 1]} : vector<3x256xf32> to vector<1x256xf32>
    %96 = vector.extract_strided_slice %93 {offsets = [2, 0], sizes = [1, 256], strides = [1, 1]} : vector<3x256xf32> to vector<1x256xf32>
    %97 = arith.mulf %94, %94 : vector<1x256xf32>
    %98 = arith.mulf %95, %95 : vector<1x256xf32>
    %99 = arith.addf %97, %98 : vector<1x256xf32>
    %100 = arith.mulf %96, %96 : vector<1x256xf32>
    %101 = arith.addf %99, %100 : vector<1x256xf32>
    %cst_37 = arith.constant 2.500000e-02 : f32
    %102 = vector.broadcast %cst_37 : f32 to vector<1x256xf32>
    %103 = arith.addf %101, %102 : vector<1x256xf32>
    %104 = math.sqrt %103 : vector<1x256xf32>
    %cst_38 = arith.constant 2.500000e-02 : f32
    %105 = vector.broadcast %cst_38 : f32 to vector<1x256xf32>
    %106 = arith.addf %94, %105 : vector<1x256xf32>
    %107 = math.log %106 : vector<1x256xf32>
    %cst_39 = arith.constant 2.500000e-02 : f32
    %108 = vector.broadcast %cst_39 : f32 to vector<1x256xf32>
    %109 = arith.addf %95, %108 : vector<1x256xf32>
    %110 = math.log %109 : vector<1x256xf32>
    %cst_40 = arith.constant 2.500000e-02 : f32
    %111 = vector.broadcast %cst_40 : f32 to vector<1x256xf32>
    %112 = arith.addf %96, %111 : vector<1x256xf32>
    %113 = math.log %112 : vector<1x256xf32>
    %114 = arith.subf %107, %110 : vector<1x256xf32>
    %cst_41 = arith.constant 5.000000e+01 : f32
    %115 = vector.broadcast %cst_41 : f32 to vector<1x256xf32>
    %116 = arith.mulf %114, %115 : vector<1x256xf32>
    %117 = arith.subf %107, %113 : vector<1x256xf32>
    %cst_42 = arith.constant 5.000000e+01 : f32
    %118 = vector.broadcast %cst_42 : f32 to vector<1x256xf32>
    %119 = arith.mulf %117, %118 : vector<1x256xf32>
    %120 = arith.subf %110, %113 : vector<1x256xf32>
    %cst_43 = arith.constant 5.000000e+01 : f32
    %121 = vector.broadcast %cst_43 : f32 to vector<1x256xf32>
    %122 = arith.mulf %120, %121 : vector<1x256xf32>
    %123 = vector.broadcast %116 : vector<1x256xf32> to vector<64x256xf32>
    %124 = vector.broadcast %10 : vector<64x1xf32> to vector<64x256xf32>
    %125 = arith.subf %123, %124 : vector<64x256xf32>
    %126 = arith.mulf %125, %125 : vector<64x256xf32>
    %cst_44 = arith.constant 1.000000e+00 : f32
    %127 = vector.broadcast %cst_44 : f32 to vector<64x256xf32>
    %128 = arith.addf %127, %126 : vector<64x256xf32>
    %129 = tpu.reciprocal %128 {approx = true} : vector<64x256xf32> -> vector<64x256xf32>
    %130 = vector.broadcast %119 : vector<1x256xf32> to vector<64x256xf32>
    %131 = vector.broadcast %10 : vector<64x1xf32> to vector<64x256xf32>
    %132 = arith.subf %130, %131 : vector<64x256xf32>
    %133 = arith.mulf %132, %132 : vector<64x256xf32>
    %cst_45 = arith.constant 1.000000e+00 : f32
    %134 = vector.broadcast %cst_45 : f32 to vector<64x256xf32>
    %135 = arith.addf %134, %133 : vector<64x256xf32>
    %136 = tpu.reciprocal %135 {approx = true} : vector<64x256xf32> -> vector<64x256xf32>
    %137 = vector.broadcast %122 : vector<1x256xf32> to vector<64x256xf32>
    %138 = vector.broadcast %10 : vector<64x1xf32> to vector<64x256xf32>
    %139 = arith.subf %137, %138 : vector<64x256xf32>
    %140 = arith.mulf %139, %139 : vector<64x256xf32>
    %cst_46 = arith.constant 1.000000e+00 : f32
    %141 = vector.broadcast %cst_46 : f32 to vector<64x256xf32>
    %142 = arith.addf %141, %140 : vector<64x256xf32>
    %143 = tpu.reciprocal %142 {approx = true} : vector<64x256xf32> -> vector<64x256xf32>
    %144 = vector.broadcast %104 : vector<1x256xf32> to vector<64x256xf32>
    %145 = arith.mulf %129, %144 : vector<64x256xf32>
    %146 = arith.truncf %145 : vector<64x256xf32> to vector<64x256xbf16>
    %147 = vector.broadcast %104 : vector<1x256xf32> to vector<64x256xf32>
    %148 = arith.mulf %136, %147 : vector<64x256xf32>
    %149 = arith.truncf %148 : vector<64x256xf32> to vector<64x256xbf16>
    %150 = arith.truncf %136 : vector<64x256xf32> to vector<64x256xbf16>
    %151 = arith.truncf %143 : vector<64x256xf32> to vector<64x256xbf16>
    %cst_47 = arith.constant dense<0.000000e+00> : vector<64x64xf32>
    %152 = tpu.matmul %146, %150, %cst_47 {dimension_numbers = #tpu.dot_dimension_numbers<[1], [1], [0], [0], [0, 0, 1, 0], [], []>} : vector<64x256xbf16>, vector<64x256xbf16>, vector<64x64xf32> -> vector<64x64xf32>
    %cst_48 = arith.constant dense<0.000000e+00> : vector<64x64xf32>
    %153 = tpu.matmul %146, %151, %cst_48 {dimension_numbers = #tpu.dot_dimension_numbers<[1], [1], [0], [0], [0, 0, 1, 0], [], []>} : vector<64x256xbf16>, vector<64x256xbf16>, vector<64x64xf32> -> vector<64x64xf32>
    %cst_49 = arith.constant dense<0.000000e+00> : vector<64x64xf32>
    %154 = tpu.matmul %149, %151, %cst_49 {dimension_numbers = #tpu.dot_dimension_numbers<[1], [1], [0], [0], [0, 0, 1, 0], [], []>} : vector<64x256xbf16>, vector<64x256xbf16>, vector<64x64xf32> -> vector<64x64xf32>
    %c0_50 = arith.constant 0 : index
    %c0_51 = arith.constant 0 : index
    %c0_52 = arith.constant 0 : index
    %155 = vector.load %arg6[%c0_50, %c0_51, %c0_52] : memref<3x64x64xf32, #tpu.memory_space<vmem>>, vector<1x64x64xf32>
    %156 = vector.shape_cast %155 : vector<1x64x64xf32> to vector<64x64xf32>
    %157 = arith.addf %156, %152 : vector<64x64xf32>
    %c0_53 = arith.constant 0 : index
    %c0_54 = arith.constant 0 : index
    %c0_55 = arith.constant 0 : index
    %158 = vector.load %arg6[%c0_53, %c0_54, %c0_55] : memref<3x64x64xf32, #tpu.memory_space<vmem>>, vector<1x64x64xf32>
    %159 = vector.shape_cast %158 : vector<1x64x64xf32> to vector<64x64xf32>
    %160 = vector.shape_cast %157 : vector<64x64xf32> to vector<1x64x64xf32>
    tpu.vector_store %arg6[%c0_53, %c0_54, %c0_55], %160 {strides = array<i32>} : memref<3x64x64xf32, #tpu.memory_space<vmem>>, vector<1x64x64xf32>,
    %c1_56 = arith.constant 1 : index
    %c0_57 = arith.constant 0 : index
    %c0_58 = arith.constant 0 : index
    %161 = vector.load %arg6[%c1_56, %c0_57, %c0_58] : memref<3x64x64xf32, #tpu.memory_space<vmem>>, vector<1x64x64xf32>
    %162 = vector.shape_cast %161 : vector<1x64x64xf32> to vector<64x64xf32>
    %163 = arith.addf %162, %153 : vector<64x64xf32>
    %c1_59 = arith.constant 1 : index
    %c0_60 = arith.constant 0 : index
    %c0_61 = arith.constant 0 : index
    %164 = vector.load %arg6[%c1_59, %c0_60, %c0_61] : memref<3x64x64xf32, #tpu.memory_space<vmem>>, vector<1x64x64xf32>
    %165 = vector.shape_cast %164 : vector<1x64x64xf32> to vector<64x64xf32>
    %166 = vector.shape_cast %163 : vector<64x64xf32> to vector<1x64x64xf32>
    tpu.vector_store %arg6[%c1_59, %c0_60, %c0_61], %166 {strides = array<i32>} : memref<3x64x64xf32, #tpu.memory_space<vmem>>, vector<1x64x64xf32>,
    %c2_62 = arith.constant 2 : index
    %c0_63 = arith.constant 0 : index
    %c0_64 = arith.constant 0 : index
    %167 = vector.load %arg6[%c2_62, %c0_63, %c0_64] : memref<3x64x64xf32, #tpu.memory_space<vmem>>, vector<1x64x64xf32>
    %168 = vector.shape_cast %167 : vector<1x64x64xf32> to vector<64x64xf32>
    %169 = arith.addf %168, %154 : vector<64x64xf32>
    %c2_65 = arith.constant 2 : index
    %c0_66 = arith.constant 0 : index
    %c0_67 = arith.constant 0 : index
    %170 = vector.load %arg6[%c2_65, %c0_66, %c0_67] : memref<3x64x64xf32, #tpu.memory_space<vmem>>, vector<1x64x64xf32>
    %171 = vector.shape_cast %170 : vector<1x64x64xf32> to vector<64x64xf32>
    %172 = vector.shape_cast %169 : vector<64x64xf32> to vector<1x64x64xf32>
    tpu.vector_store %arg6[%c2_65, %c0_66, %c0_67], %172 {strides = array<i32>} : memref<3x64x64xf32, #tpu.memory_space<vmem>>, vector<1x64x64xf32>,
    %c0_i32_68 = arith.constant 0 : i32
    %173 = arith.cmpi eq, %arg1, %c0_i32_68 : i32
    %174 = arith.extui %173 : i1 to i32
    %c0_i32_69 = arith.constant 0 : i32
    %175 = arith.cmpi ne, %174, %c0_i32_69 : i32
    scf.if %175 {
      %c0_70 = arith.constant 0 : index
      %c0_71 = arith.constant 0 : index
      %c0_72 = arith.constant 0 : index
      %176 = vector.load %arg5[%c0_70, %c0_71, %c0_72] : memref<3x64x64xf32, #tpu.memory_space<vmem>>, vector<3x64x64xf32>
      %c0_73 = arith.constant 0 : index
      %c0_74 = arith.constant 0 : index
      %c0_75 = arith.constant 0 : index
      %177 = vector.load %arg6[%c0_73, %c0_74, %c0_75] : memref<3x64x64xf32, #tpu.memory_space<vmem>>, vector<3x64x64xf32>
      %178 = vector.shape_cast %176 : vector<3x64x64xf32> to vector<1x3x64x64xf32>
      %cst_76 = arith.constant dense<0.000000e+00> : vector<1xf32>
      %179 = vector.multi_reduction <add>, %178, %cst_76 [1, 2, 3] : vector<1x3x64x64xf32> to vector<1xf32>
      %180 = vector.shape_cast %179 : vector<1xf32> to vector<1x1x1x1xf32>
      %181 = vector.extract %180[0, 0, 0, 0] : f32 from vector<1x1x1x1xf32>
      %cst_77 = arith.constant 2.500000e-02 : f32
      %182 = arith.addf %181, %cst_77 : f32
      %183 = math.rsqrt %182 : f32
      %184 = vector.shape_cast %177 : vector<3x64x64xf32> to vector<1x3x64x64xf32>
      %cst_78 = arith.constant dense<0.000000e+00> : vector<1xf32>
      %185 = vector.multi_reduction <add>, %184, %cst_78 [1, 2, 3] : vector<1x3x64x64xf32> to vector<1xf32>
      %186 = vector.shape_cast %185 : vector<1xf32> to vector<1x1x1x1xf32>
      %187 = vector.extract %186[0, 0, 0, 0] : f32 from vector<1x1x1x1xf32>
      %cst_79 = arith.constant 2.500000e-02 : f32
      %188 = arith.addf %187, %cst_79 : f32
      %189 = math.rsqrt %188 : f32
      %190 = math.sqrt %177 : vector<3x64x64xf32>
      %191 = vector.broadcast %189 : f32 to vector<3x64x64xf32>
      %192 = arith.mulf %190, %191 : vector<3x64x64xf32>
      %193 = math.sqrt %176 : vector<3x64x64xf32>
      %194 = vector.broadcast %183 : f32 to vector<3x64x64xf32>
      %195 = arith.mulf %193, %194 : vector<3x64x64xf32>
      %196 = arith.subf %192, %195 : vector<3x64x64xf32>
      %197 = arith.mulf %196, %196 : vector<3x64x64xf32>
      %198 = vector.shape_cast %197 : vector<3x64x64xf32> to vector<1x3x64x64xf32>
      %cst_80 = arith.constant dense<0.000000e+00> : vector<1xf32>
      %199 = vector.multi_reduction <add>, %198, %cst_80 [1, 2, 3] : vector<1x3x64x64xf32> to vector<1xf32>
      %200 = vector.shape_cast %199 : vector<1xf32> to vector<1x1x1x1xf32>
      %201 = vector.extract %200[0, 0, 0, 0] : f32 from vector<1x1x1x1xf32>
      %202 = vector.broadcast %201 : f32 to vector<1x1x1xf32>
      %c0_81 = arith.constant 0 : index
      %c0_82 = arith.constant 0 : index
      %c0_83 = arith.constant 0 : index
      %203 = vector.load %arg4[%c0_81, %c0_82, %c0_83] : memref<1x1x1xf32, #tpu.memory_space<vmem>>, vector<1x1x1xf32>
      tpu.vector_store %arg4[%c0_81, %c0_82, %c0_83], %202 {strides = array<i32>} : memref<1x1x1xf32, #tpu.memory_space<vmem>>, vector<1x1x1xf32>,
    } else {
    }
    return
  }
  func.func @transform_0(%arg0: i32, %arg1: i32) -> (i32, i32, i32) {
    %c0_i32 = arith.constant 0 : i32
    %c0_i32_0 = arith.constant 0 : i32
    return %arg0, %c0_i32, %arg1 : i32, i32, i32
  }
  func.func @transform_1(%arg0: i32, %arg1: i32) -> (i32, i32, i32) {
    %c0_i32 = arith.constant 0 : i32
    %c0_i32_0 = arith.constant 0 : i32
    return %arg0, %c0_i32, %arg1 : i32, i32, i32
  }
  func.func @transform_2(%arg0: i32, %arg1: i32) -> (i32, i32, i32) {
    %c0_i32 = arith.constant 0 : i32
    %c0_i32_0 = arith.constant 0 : i32
    %c0_i32_1 = arith.constant 0 : i32
    return %arg0, %c0_i32, %c0_i32_0 : i32, i32, i32
  }
}

</mosaic_0001>

<llo_original>
// kernel: tpu_custom_call.1
$region0: #{tpu_custom_call.1}
  #allocation0 [shape = 'u32[]', space=smem, size = 0x4, offset = 0x4, fixed_abs, tag = 'smem constant byte address 0x4 - core index']
  #allocation1 [shape = 'u32[72,128]{1,0:T(1,128)}', space=vmem, size = 0x9000, scoped, tag = 'internal scratch']
  #allocation2 [shape = 'f32[3,64,64]{2,1,0:T(8,128)}', space=vmem, size = 0x18000, scoped, tag = 'scratch operand']
  #allocation3 [shape = 'f32[3,64,64]{2,1,0:T(8,128)}', space=vmem, size = 0x18000, scoped, tag = 'scratch operand']
  %s0 = inlined_call_operand.vmem [shape: f32[2,3,256], index: 0, kind: input, shape index: {}]
  %s1 = inlined_call_operand.vmem [shape: f32[2,3,256], index: 1, kind: input, shape index: {}]
  %s2 = inlined_call_operand.vmem [shape: f32[2,1,1], index: 2, kind: output, shape index: {}]
  %s3 = sld [smem:[#allocation0]]
  $region49: #{tpu_custom_call.1} parent=0
    _
  %s5 = ssub.s32 1, %s3
  %s6 = scalar_select 0, %s5, %s3
  loop: start=0, step=1, limit=4
  $region2: #{tpu_custom_call.1} parent=0 // loop_pre_header
    _
  $region3: #{tpu_custom_call.1} parent=0 // loop_header
    %s8 = sphi 0, %s12
    %p9 = scmp.ge.s32.totalorder %s8, 4
    %s15 = sphi 0, %s27
    %s16 = sphi 0, %s23
    %s17 = sphi 0, %s15
    %s18 = sphi 0, %s16
    %s19 = sphi 0, %s17
    %s20 = sphi 0, %s18
    %s32 = sphi 0, %s34
    %s35 = sphi 0, %s32
    %s36 = sphi 0, %s35
    %s52 = sphi 0, %s36
    %s60 = sphi 0, %s62
    %s63 = sphi 0, %s60
    %s64 = sphi 0, %s63
    %s80 = sphi 0, %s64
    %s86 = sphi 0, %s88
    %s89 = sphi 0, %s86
    %s90 = sphi 0, %s89
    %s106 = sphi 0, %s90
  $region4: #{tpu_custom_call.1} parent=0 // loop_header_branch
    %11 = sbr.rel (%p9) target = $region8
  $region5: #{tpu_custom_call.1} parent=0 // loop_body
    %s13 = ssub.s32 %s8, 1
    %s14 = ssub.s32 %s8, 2
    %s21 = sadd.s32 1, %s16
    %p22 = scmp.ge.s32.totalorder %s21, 1
    %s23 = scalar_select %p22, 0, %s21
    %s24 = sadd.s32 1, %s15
    %s25 = scalar_select %p22, %s24, %s15
    %p26 = scmp.ge.s32.totalorder %s25, 2
    %s27 = scalar_select %p26, 0, %s25
    %s28 = ssub.s32 %s15, %s27
    %s29 = ssub.s32 %s16, %s23
    %s30 = sor.u32 %s28, %s29
    %p31 = scmp.eq.s32.totalorder %s30, 0
    %s33 = sadd.s32 %s32, 1
    %s34 = scalar_select %p31, %s32, %s33
    %p37 = pneg %p31
    %p38 = scmp.eq.s32.totalorder %s8, 1
    %p39 = por %p37, %p38
    %p40 = scmp.ne.s32.totalorder %s32, %s35
    %p41 = scmp.eq.s32.totalorder %s8, 0
    %p42 = por %p40, %p41
    %p43 = scmp.ne.s32.totalorder %s32, %s35
    %p44 = scmp.eq.s32.totalorder %s13, 1
    %p45 = por %p43, %p44
    %p46 = scmp.ne.s32.totalorder %s35, %s36
    %p47 = scmp.eq.s32.totalorder %s13, 0
    %p48 = por %p46, %p47
    %p49 = scmp.ne.s32.totalorder %s35, %s36
    %p50 = scmp.eq.s32.totalorder %s14, 1
    %p51 = por %p49, %p50
    %p53 = scmp.ne.s32.totalorder %s36, %s52
    %p54 = scmp.eq.s32.totalorder %s14, 0
    %p55 = por %p53, %p54
    %s56 = ssub.s32 %s15, %s27
    %s57 = ssub.s32 %s16, %s23
    %s58 = sor.u32 %s56, %s57
    %p59 = scmp.eq.s32.totalorder %s58, 0
    %s61 = sadd.s32 %s60, 1
    %s62 = scalar_select %p59, %s60, %s61
    %p65 = pneg %p59
    %p66 = scmp.eq.s32.totalorder %s8, 1
    %p67 = por %p65, %p66
    %p68 = scmp.ne.s32.totalorder %s60, %s63
    %p69 = scmp.eq.s32.totalorder %s8, 0
    %p70 = por %p68, %p69
    %p71 = scmp.ne.s32.totalorder %s60, %s63
    %p72 = scmp.eq.s32.totalorder %s13, 1
    %p73 = por %p71, %p72
    %p74 = scmp.ne.s32.totalorder %s63, %s64
    %p75 = scmp.eq.s32.totalorder %s13, 0
    %p76 = por %p74, %p75
    %p77 = scmp.ne.s32.totalorder %s63, %s64
    %p78 = scmp.eq.s32.totalorder %s14, 1
    %p79 = por %p77, %p78
    %p81 = scmp.ne.s32.totalorder %s64, %s80
    %p82 = scmp.eq.s32.totalorder %s14, 0
    %p83 = por %p81, %p82
    %s84 = ssub.s32 %s15, %s27
    %p85 = scmp.eq.s32.totalorder %s84, 0
    %s87 = sadd.s32 %s86, 1
    %s88 = scalar_select %p85, %s86, %s87
    %p91 = pneg %p85
    %p92 = scmp.eq.s32.totalorder %s8, 1
    %p93 = por %p91, %p92
    %p94 = scmp.ne.s32.totalorder %s86, %s89
    %p95 = scmp.eq.s32.totalorder %s8, 0
    %p96 = por %p94, %p95
    %p97 = scmp.ne.s32.totalorder %s86, %s89
    %p98 = scmp.eq.s32.totalorder %s13, 1
    %p99 = por %p97, %p98
    %p100 = scmp.ne.s32.totalorder %s89, %s90
    %p101 = scmp.eq.s32.totalorder %s13, 0
    %p102 = por %p100, %p101
    %p103 = scmp.ne.s32.totalorder %s89, %s90
    %p104 = scmp.eq.s32.totalorder %s14, 1
    %p105 = por %p103, %p104
    %p107 = scmp.ne.s32.totalorder %s90, %s106
    %p108 = scmp.eq.s32.totalorder %s14, 0
    %p109 = por %p107, %p108
    %p110 = scmp.le.s32.totalorder 1, %s8
    %p111 = scmp.lt.s32.totalorder %s8, 3
    %p112 = pnand %p110, %p111
    %p113 = pneg %p112
    // Predicated region
    $region9: #{tpu_custom_call.1} parent=5 // pred_check
      _
    $region10: #{tpu_custom_call.1} parent=5 // pred_check_branch
      %115 = sbr.rel (%p112) target = $region12
    $region11: #{tpu_custom_call.1} parent=5 // pred_region
      %s116 = ssub.s32 %s8, 1
    $region12: #{tpu_custom_call.1} parent=5 // pred_fallthru
      _
    %p117 = scmp.lt.s32.totalorder %s8, 2
    // Predicated region
    $region13: #{tpu_custom_call.1} parent=5 // pred_check
      %p118 = pneg %p117
    $region14: #{tpu_custom_call.1} parent=5 // pred_check_branch
      %120 = sbr.rel (%p118) target = $region16
    $region15: #{tpu_custom_call.1} parent=5 // pred_region
      // Predicated region
      $region17: #{tpu_custom_call.1} parent=15 // pred_check
        %p121 = pneg %p42
      $region18: #{tpu_custom_call.1} parent=15 // pred_check_branch
        %123 = sbr.rel (%p121) target = $region20
      $region19: #{tpu_custom_call.1} parent=15 // pred_region
        %s124 = smul.u32 2, %s16
        %p125 = scmp.lt.s32.totalorder %s15, 1
        %s126 = scalar_select %p125, %s15, 1
        %p127 = scmp.lt.s32.totalorder %s124, 1
        %s128 = scalar_select %p127, %s124, 1
        %s129 = smul.addr %s126, 2
        %s130 = sadd.s32 %s128, %s129
        %s131 = smul.addr %s130, 4
        %s132 = scalar_lea.vmem %s0, %s131
        %s133 = smul.u32 2, %s16
      $region20: #{tpu_custom_call.1} parent=15 // pred_fallthru
        _
      // Predicated region
      $region21: #{tpu_custom_call.1} parent=15 // pred_check
        %p134 = pneg %p70
      $region22: #{tpu_custom_call.1} parent=15 // pred_check_branch
        %136 = sbr.rel (%p134) target = $region24
      $region23: #{tpu_custom_call.1} parent=15 // pred_region
        %s137 = smul.u32 2, %s16
        %p138 = scmp.lt.s32.totalorder %s15, 1
        %s139 = scalar_select %p138, %s15, 1
        %p140 = scmp.lt.s32.totalorder %s137, 1
        %s141 = scalar_select %p140, %s137, 1
        %s142 = smul.addr %s139, 2
        %s143 = sadd.s32 %s141, %s142
        %s144 = smul.addr %s143, 4
        %s145 = scalar_lea.vmem %s1, %s144
        %s146 = smul.u32 2, %s16
      $region24: #{tpu_custom_call.1} parent=15 // pred_fallthru
        _
    $region16: #{tpu_custom_call.1} parent=5 // pred_fallthru
      _
    %p147 = scmp.le.s32.totalorder 1, %s8
    %p148 = scmp.lt.s32.totalorder %s8, 3
    %p149 = pnand %p147, %p148
    %p150 = pneg %p149
    // Predicated region
    $region25: #{tpu_custom_call.1} parent=5 // pred_check
      _
    $region26: #{tpu_custom_call.1} parent=5 // pred_check_branch
      %152 = sbr.rel (%p149) target = $region28
    $region27: #{tpu_custom_call.1} parent=5 // pred_region
      %s153 = ssub.s32 %s8, 1
      %s154 = smul.u32 2, %s18
      %p155 = scmp.lt.s32.totalorder %s17, 1
      %s156 = scalar_select %p155, %s17, 1
      %p157 = scmp.lt.s32.totalorder %s154, 1
      %s158 = scalar_select %p157, %s154, 1
      %s159 = smul.addr %s156, 2
      %s160 = sadd.s32 %s158, %s159
      %s161 = smul.addr %s160, 4
      %s162 = scalar_lea.vmem %s0, %s161
      %p163 = pneg %p48
      %p164 = pneg %p45
      %s165 = smul.u32 2, %s18
      %p166 = scmp.lt.s32.totalorder %s17, 1
      %s167 = scalar_select %p166, %s17, 1
      %p168 = scmp.lt.s32.totalorder %s165, 1
      %s169 = scalar_select %p168, %s165, 1
      %s170 = smul.addr %s167, 2
      %s171 = sadd.s32 %s169, %s170
      %s172 = smul.addr %s171, 4
      %s173 = scalar_lea.vmem %s1, %s172
      %p174 = pneg %p76
      %p175 = pneg %p73
      %p176 = pneg %p102
      %p177 = pneg %p99
      %p178 = scmp.lt.s32.totalorder %s17, 1
      %s179 = scalar_select %p178, %s17, 1
      %s180 = scalar_lea.vmem %s2, %s179
      %s181 = smul.u32 2, %s18
      %p182 = scmp.lt.s32.totalorder %s17, 1
      %s183 = scalar_select %p182, %s17, 1
      %p184 = scmp.lt.s32.totalorder %s181, 1
      %s185 = scalar_select %p184, %s181, 1
      %s186 = smul.addr %s183, 2
      %s187 = sadd.s32 %s185, %s186
      %s188 = smul.addr %s187, 4
      %s189 = scalar_lea.vmem %s0, %s188
      %s190 = smul.u32 2, %s18
      %s191 = smul.u32 2, %s18
      %p192 = scmp.lt.s32.totalorder %s17, 1
      %s193 = scalar_select %p192, %s17, 1
      %p194 = scmp.lt.s32.totalorder %s191, 1
      %s195 = scalar_select %p194, %s191, 1
      %s196 = smul.addr %s193, 2
      %s197 = sadd.s32 %s195, %s196
      %s198 = smul.addr %s197, 4
      %s199 = scalar_lea.vmem %s1, %s198
      %s200 = smul.u32 2, %s18
      %p201 = scmp.lt.s32.totalorder %s17, 1
      %s202 = scalar_select %p201, %s17, 1
      %s203 = scalar_lea.vmem %s2, %s202
      %p205 = scmp.eq.s32.totalorder %s18, 0
      // Predicated region
      $region29: #{tpu_custom_call.1} parent=27 // pred_check
        %p206 = pneg %p205
      $region30: #{tpu_custom_call.1} parent=27 // pred_check_branch
        %208 = sbr.rel (%p206) target = $region32
      $region31: #{tpu_custom_call.1} parent=27 // pred_region
        %vm209 = vcmask 523264
        %210 = vst.msk [vmem:[#allocation2] sm:$0xff] %vm209, 0.0
        %211 = vst.msk [vmem:[#allocation2 + $0x8] sm:$0xff] %vm209, 0.0
        %212 = vst.msk [vmem:[#allocation2 + $0x10] sm:$0xff] %vm209, 0.0
        %213 = vst.msk [vmem:[#allocation2 + $0x18] sm:$0xff] %vm209, 0.0
        %214 = vst.msk [vmem:[#allocation2 + $0x20] sm:$0xff] %vm209, 0.0
        %215 = vst.msk [vmem:[#allocation2 + $0x28] sm:$0xff] %vm209, 0.0
        %216 = vst.msk [vmem:[#allocation2 + $0x30] sm:$0xff] %vm209, 0.0
        %217 = vst.msk [vmem:[#allocation2 + $0x38] sm:$0xff] %vm209, 0.0
        %218 = vst.msk [vmem:[#allocation2 + $0x40] sm:$0xff] %vm209, 0.0
        %219 = vst.msk [vmem:[#allocation2 + $0x48] sm:$0xff] %vm209, 0.0
        %220 = vst.msk [vmem:[#allocation2 + $0x50] sm:$0xff] %vm209, 0.0
        %221 = vst.msk [vmem:[#allocation2 + $0x58] sm:$0xff] %vm209, 0.0
        %222 = vst.msk [vmem:[#allocation2 + $0x60] sm:$0xff] %vm209, 0.0
        %223 = vst.msk [vmem:[#allocation2 + $0x68] sm:$0xff] %vm209, 0.0
        %224 = vst.msk [vmem:[#allocation2 + $0x70] sm:$0xff] %vm209, 0.0
        %225 = vst.msk [vmem:[#allocation2 + $0x78] sm:$0xff] %vm209, 0.0
        %226 = vst.msk [vmem:[#allocation2 + $0x80] sm:$0xff] %vm209, 0.0
        %227 = vst.msk [vmem:[#allocation2 + $0x88] sm:$0xff] %vm209, 0.0
        %228 = vst.msk [vmem:[#allocation2 + $0x90] sm:$0xff] %vm209, 0.0
        %229 = vst.msk [vmem:[#allocation2 + $0x98] sm:$0xff] %vm209, 0.0
        %230 = vst.msk [vmem:[#allocation2 + $0xa0] sm:$0xff] %vm209, 0.0
        %231 = vst.msk [vmem:[#allocation2 + $0xa8] sm:$0xff] %vm209, 0.0
        %232 = vst.msk [vmem:[#allocation2 + $0xb0] sm:$0xff] %vm209, 0.0
        %233 = vst.msk [vmem:[#allocation2 + $0xb8] sm:$0xff] %vm209, 0.0
        %234 = vst.msk [vmem:[#allocation3] sm:$0xff] %vm209, 0.0
        %235 = vst.msk [vmem:[#allocation3 + $0x8] sm:$0xff] %vm209, 0.0
        %236 = vst.msk [vmem:[#allocation3 + $0x10] sm:$0xff] %vm209, 0.0
        %237 = vst.msk [vmem:[#allocation3 + $0x18] sm:$0xff] %vm209, 0.0
        %238 = vst.msk [vmem:[#allocation3 + $0x20] sm:$0xff] %vm209, 0.0
        %239 = vst.msk [vmem:[#allocation3 + $0x28] sm:$0xff] %vm209, 0.0
        %240 = vst.msk [vmem:[#allocation3 + $0x30] sm:$0xff] %vm209, 0.0
        %241 = vst.msk [vmem:[#allocation3 + $0x38] sm:$0xff] %vm209, 0.0
        %242 = vst.msk [vmem:[#allocation3 + $0x40] sm:$0xff] %vm209, 0.0
        %243 = vst.msk [vmem:[#allocation3 + $0x48] sm:$0xff] %vm209, 0.0
        %244 = vst.msk [vmem:[#allocation3 + $0x50] sm:$0xff] %vm209, 0.0
        %245 = vst.msk [vmem:[#allocation3 + $0x58] sm:$0xff] %vm209, 0.0
        %246 = vst.msk [vmem:[#allocation3 + $0x60] sm:$0xff] %vm209, 0.0
        %247 = vst.msk [vmem:[#allocation3 + $0x68] sm:$0xff] %vm209, 0.0
        %248 = vst.msk [vmem:[#allocation3 + $0x70] sm:$0xff] %vm209, 0.0
        %249 = vst.msk [vmem:[#allocation3 + $0x78] sm:$0xff] %vm209, 0.0
        %250 = vst.msk [vmem:[#allocation3 + $0x80] sm:$0xff] %vm209, 0.0
        %251 = vst.msk [vmem:[#allocation3 + $0x88] sm:$0xff] %vm209, 0.0
        %252 = vst.msk [vmem:[#allocation3 + $0x90] sm:$0xff] %vm209, 0.0
        %253 = vst.msk [vmem:[#allocation3 + $0x98] sm:$0xff] %vm209, 0.0
        %254 = vst.msk [vmem:[#allocation3 + $0xa0] sm:$0xff] %vm209, 0.0
        %255 = vst.msk [vmem:[#allocation3 + $0xa8] sm:$0xff] %vm209, 0.0
        %256 = vst.msk [vmem:[#allocation3 + $0xb0] sm:$0xff] %vm209, 0.0
        %257 = vst.msk [vmem:[#allocation3 + $0xb8] sm:$0xff] %vm209, 0.0
      $region32: #{tpu_custom_call.1} parent=27 // pred_fallthru
        _
      %v258 = vlaneseq
      %v259 = vshrl.u32 %v258, 7
      %v260 = vadd.s32 %v259, 8
      %v261 = vadd.s32 %v259, 16
      %v262 = vadd.s32 %v259, 24
      %v263 = vadd.s32 %v259, 32
      %v264 = vadd.s32 %v259, 40
      %v265 = vadd.s32 %v259, 48
      %v266 = vadd.s32 %v259, 56
      %v267 = vcvt.s32.f32 %v259
      %v268 = vcvt.s32.f32 %v260
      %v269 = vcvt.s32.f32 %v261
      %v270 = vcvt.s32.f32 %v262
      %v271 = vcvt.s32.f32 %v263
      %v272 = vcvt.s32.f32 %v264
      %v273 = vcvt.s32.f32 %v265
      %v274 = vcvt.s32.f32 %v266
      %v275 = vmul.f32 %v267, 0.0952381
      %v276 = vmul.f32 %v268, 0.0952381
      %v277 = vmul.f32 %v269, 0.0952381
      %v278 = vmul.f32 %v270, 0.0952381
      %v279 = vmul.f32 %v271, 0.0952381
      %v280 = vmul.f32 %v272, 0.0952381
      %v281 = vmul.f32 %v273, 0.0952381
      %v282 = vmul.f32 %v274, 0.0952381
      %v283 = vadd.f32 %v275, -3.0
      %v284 = vadd.f32 %v276, -3.0
      %v285 = vadd.f32 %v277, -3.0
      %v286 = vadd.f32 %v278, -3.0
      %v287 = vadd.f32 %v279, -3.0
      %v288 = vadd.f32 %v280, -3.0
      %v289 = vadd.f32 %v281, -3.0
      %v290 = vadd.f32 %v282, -3.0
      %v291 = vmul.f32 %v283, 50.0
      %v292 = vmul.f32 %v284, 50.0
      %v293 = vmul.f32 %v285, 50.0
      %v294 = vmul.f32 %v286, 50.0
      %v295 = vmul.f32 %v287, 50.0
      %v296 = vmul.f32 %v288, 50.0
      %v297 = vmul.f32 %v289, 50.0
      %v298 = vmul.f32 %v290, 50.0
      %v299 = vld [vmem:[%s189] sm:$0x77]
      %v300 = vmul.f32 %v299, %v299
      %v302 = vrot.slane %v300, 5
      %v303 = vrot.slane %v302, 4
      %v305 = vadd.f32 %v300, %v303
      %v306 = vrot.slane %v300, 6
      %v307 = vrot.slane %v306, 4
      %v309 = vadd.f32 %v305, %v307
      %v310 = vadd.f32 %v309, 0.025
      %v311 = vrsqrt.pop %v310
      %v312 = vmul.f32 %v311, %v310
      %v313 = vmul.f32 %v312, %v311
      %v314 = vmul.f32 0.5, %v313
      %v315 = vsub.f32 1.5, %v314
      %v316 = vmul.f32 %v311, %v315
      %v317 = vmul.f32 %v310, %v316
      %vm318 = vcmp.eq.f32.partialorder %v310, inf
      %v319 = vsel %vm318, %v310, %v317
      %vm320 = vcmp.eq.f32.partialorder %v310, 0.0
      %v321 = vand.u32 %v310, 2147483648
      %v322 = vsel %vm320, %v321, %v319
      %v323 = vadd.f32 %v299, 0.025
      %v324 = vlog2.pop %v323
      %v325 = vmul.f32 %v324, 0.6931472
      %v327 = vrot.slane %v325, 5
      %v328 = vrot.slane %v327, 4
      %v330 = vsub.f32 %v325, %v328
      %v331 = vmul.f32 %v330, 50.0
      %v332 = vrot.slane %v325, 6
      %v333 = vrot.slane %v332, 4
      %v335 = vsub.f32 %v325, %v333
      %v336 = vmul.f32 %v335, 50.0
      %v338 = vperm.slane %v331, 0
      %v339 = vperm.slane %v331, 4
      %v342 = vperm.slane %v338, 0
      %v343 = vperm.slane %v339, 0
      %v344 = vsub.f32 %v342, %v291
      %v345 = vsub.f32 %v343, %v291
      %v346 = vsub.f32 %v342, %v292
      %v347 = vsub.f32 %v343, %v292
      %v348 = vsub.f32 %v342, %v293
      %v349 = vsub.f32 %v343, %v293
      %v350 = vsub.f32 %v342, %v294
      %v351 = vsub.f32 %v343, %v294
      %v352 = vsub.f32 %v342, %v295
      %v353 = vsub.f32 %v343, %v295
      %v354 = vsub.f32 %v342, %v296
      %v355 = vsub.f32 %v343, %v296
      %v356 = vsub.f32 %v342, %v297
      %v357 = vsub.f32 %v343, %v297
      %v358 = vsub.f32 %v342, %v298
      %v359 = vsub.f32 %v343, %v298
      %v360 = vmul.f32 %v344, %v344
      %v361 = vmul.f32 %v345, %v345
      %v362 = vmul.f32 %v346, %v346
      %v363 = vmul.f32 %v347, %v347
      %v364 = vmul.f32 %v348, %v348
      %v365 = vmul.f32 %v349, %v349
      %v366 = vmul.f32 %v350, %v350
      %v367 = vmul.f32 %v351, %v351
      %v368 = vmul.f32 %v352, %v352
      %v369 = vmul.f32 %v353, %v353
      %v370 = vmul.f32 %v354, %v354
      %v371 = vmul.f32 %v355, %v355
      %v372 = vmul.f32 %v356, %v356
      %v373 = vmul.f32 %v357, %v357
      %v374 = vmul.f32 %v358, %v358
      %v375 = vmul.f32 %v359, %v359
      %v376 = vadd.f32 %v360, 1.0
      %v377 = vadd.f32 %v361, 1.0
      %v378 = vadd.f32 %v362, 1.0
      %v379 = vadd.f32 %v363, 1.0
      %v380 = vadd.f32 %v364, 1.0
      %v381 = vadd.f32 %v365, 1.0
      %v382 = vadd.f32 %v366, 1.0
      %v383 = vadd.f32 %v367, 1.0
      %v384 = vadd.f32 %v368, 1.0
      %v385 = vadd.f32 %v369, 1.0
      %v386 = vadd.f32 %v370, 1.0
      %v387 = vadd.f32 %v371, 1.0
      %v388 = vadd.f32 %v372, 1.0
      %v389 = vadd.f32 %v373, 1.0
      %v390 = vadd.f32 %v374, 1.0
      %v391 = vadd.f32 %v375, 1.0
      %v392 = vrcp.pop %v376
      %v393 = vrcp.pop %v377
      %v394 = vrcp.pop %v378
      %v395 = vrcp.pop %v379
      %v396 = vrcp.pop %v380
      %v397 = vrcp.pop %v381
      %v398 = vrcp.pop %v382
      %v399 = vrcp.pop %v383
      %v400 = vrcp.pop %v384
      %v401 = vrcp.pop %v385
      %v402 = vrcp.pop %v386
      %v403 = vrcp.pop %v387
      %v404 = vrcp.pop %v388
      %v405 = vrcp.pop %v389
      %v406 = vrcp.pop %v390
      %v407 = vrcp.pop %v391
      %v409 = vperm.slane %v336, 0
      %v410 = vperm.slane %v336, 4
      %v413 = vperm.slane %v409, 0
      %v414 = vperm.slane %v410, 0
      %v415 = vsub.f32 %v413, %v291
      %v416 = vsub.f32 %v414, %v291
      %v417 = vsub.f32 %v413, %v292
      %v418 = vsub.f32 %v414, %v292
      %v419 = vsub.f32 %v413, %v293
      %v420 = vsub.f32 %v414, %v293
      %v421 = vsub.f32 %v413, %v294
      %v422 = vsub.f32 %v414, %v294
      %v423 = vsub.f32 %v413, %v295
      %v424 = vsub.f32 %v414, %v295
      %v425 = vsub.f32 %v413, %v296
      %v426 = vsub.f32 %v414, %v296
      %v427 = vsub.f32 %v413, %v297
      %v428 = vsub.f32 %v414, %v297
      %v429 = vsub.f32 %v413, %v298
      %v430 = vsub.f32 %v414, %v298
      %v431 = vmul.f32 %v415, %v415
      %v432 = vmul.f32 %v416, %v416
      %v433 = vmul.f32 %v417, %v417
      %v434 = vmul.f32 %v418, %v418
      %v435 = vmul.f32 %v419, %v419
      %v436 = vmul.f32 %v420, %v420
      %v437 = vmul.f32 %v421, %v421
      %v438 = vmul.f32 %v422, %v422
      %v439 = vmul.f32 %v423, %v423
      %v440 = vmul.f32 %v424, %v424
      %v441 = vmul.f32 %v425, %v425
      %v442 = vmul.f32 %v426, %v426
      %v443 = vmul.f32 %v427, %v427
      %v444 = vmul.f32 %v428, %v428
      %v445 = vmul.f32 %v429, %v429
      %v446 = vmul.f32 %v430, %v430
      %v447 = vadd.f32 %v431, 1.0
      %v448 = vadd.f32 %v432, 1.0
      %v449 = vadd.f32 %v433, 1.0
      %v450 = vadd.f32 %v434, 1.0
      %v451 = vadd.f32 %v435, 1.0
      %v452 = vadd.f32 %v436, 1.0
      %v453 = vadd.f32 %v437, 1.0
      %v454 = vadd.f32 %v438, 1.0
      %v455 = vadd.f32 %v439, 1.0
      %v456 = vadd.f32 %v440, 1.0
      %v457 = vadd.f32 %v441, 1.0
      %v458 = vadd.f32 %v442, 1.0
      %v459 = vadd.f32 %v443, 1.0
      %v460 = vadd.f32 %v444, 1.0
      %v461 = vadd.f32 %v445, 1.0
      %v462 = vadd.f32 %v446, 1.0
      %v463 = vrcp.pop %v447
      %v464 = vrcp.pop %v448
      %v465 = vrcp.pop %v449
      %v466 = vrcp.pop %v450
      %v467 = vrcp.pop %v451
      %v468 = vrcp.pop %v452
      %v469 = vrcp.pop %v453
      %v470 = vrcp.pop %v454
      %v471 = vrcp.pop %v455
      %v472 = vrcp.pop %v456
      %v473 = vrcp.pop %v457
      %v474 = vrcp.pop %v458
      %v475 = vrcp.pop %v459
      %v476 = vrcp.pop %v460
      %v477 = vrcp.pop %v461
      %v478 = vrcp.pop %v462
      %v479 = vperm.slane %v331, 1
      %v480 = vperm.slane %v331, 5
      %v483 = vperm.slane %v479, 1
      %v484 = vperm.slane %v480, 1
      %v485 = vsub.f32 %v483, %v291
      %v486 = vsub.f32 %v484, %v291
      %v487 = vsub.f32 %v483, %v292
      %v488 = vsub.f32 %v484, %v292
      %v489 = vsub.f32 %v483, %v293
      %v490 = vsub.f32 %v484, %v293
      %v491 = vsub.f32 %v483, %v294
      %v492 = vsub.f32 %v484, %v294
      %v493 = vsub.f32 %v483, %v295
      %v494 = vsub.f32 %v484, %v295
      %v495 = vsub.f32 %v483, %v296
      %v496 = vsub.f32 %v484, %v296
      %v497 = vsub.f32 %v483, %v297
      %v498 = vsub.f32 %v484, %v297
      %v499 = vsub.f32 %v483, %v298
      %v500 = vsub.f32 %v484, %v298
      %v501 = vmul.f32 %v485, %v485
      %v502 = vmul.f32 %v486, %v486
      %v503 = vmul.f32 %v487, %v487
      %v504 = vmul.f32 %v488, %v488
      %v505 = vmul.f32 %v489, %v489
      %v506 = vmul.f32 %v490, %v490
      %v507 = vmul.f32 %v491, %v491
      %v508 = vmul.f32 %v492, %v492
      %v509 = vmul.f32 %v493, %v493
      %v510 = vmul.f32 %v494, %v494
      %v511 = vmul.f32 %v495, %v495
      %v512 = vmul.f32 %v496, %v496
      %v513 = vmul.f32 %v497, %v497
      %v514 = vmul.f32 %v498, %v498
      %v515 = vmul.f32 %v499, %v499
      %v516 = vmul.f32 %v500, %v500
      %v517 = vadd.f32 %v501, 1.0
      %v518 = vadd.f32 %v502, 1.0
      %v519 = vadd.f32 %v503, 1.0
      %v520 = vadd.f32 %v504, 1.0
      %v521 = vadd.f32 %v505, 1.0
      %v522 = vadd.f32 %v506, 1.0
      %v523 = vadd.f32 %v507, 1.0
      %v524 = vadd.f32 %v508, 1.0
      %v525 = vadd.f32 %v509, 1.0
      %v526 = vadd.f32 %v510, 1.0
      %v527 = vadd.f32 %v511, 1.0
      %v528 = vadd.f32 %v512, 1.0
      %v529 = vadd.f32 %v513, 1.0
      %v530 = vadd.f32 %v514, 1.0
      %v531 = vadd.f32 %v515, 1.0
      %v532 = vadd.f32 %v516, 1.0
      %v533 = vrcp.pop %v517
      %v534 = vrcp.pop %v518
      %v535 = vrcp.pop %v519
      %v536 = vrcp.pop %v520
      %v537 = vrcp.pop %v521
      %v538 = vrcp.pop %v522
      %v539 = vrcp.pop %v523
      %v540 = vrcp.pop %v524
      %v541 = vrcp.pop %v525
      %v542 = vrcp.pop %v526
      %v543 = vrcp.pop %v527
      %v544 = vrcp.pop %v528
      %v545 = vrcp.pop %v529
      %v546 = vrcp.pop %v530
      %v547 = vrcp.pop %v531
      %v548 = vrcp.pop %v532
      %v550 = vperm.slane %v322, 0
      %v551 = vperm.slane %v322, 4
      %v554 = vperm.slane %v550, 0
      %v555 = vperm.slane %v551, 0
      %v556 = vmul.f32 %v392, %v554
      %v557 = vmul.f32 %v393, %v555
      %v558 = vmul.f32 %v394, %v554
      %v559 = vmul.f32 %v395, %v555
      %v560 = vmul.f32 %v396, %v554
      %v561 = vmul.f32 %v397, %v555
      %v562 = vmul.f32 %v398, %v554
      %v563 = vmul.f32 %v399, %v555
      %v564 = vmul.f32 %v400, %v554
      %v565 = vmul.f32 %v401, %v555
      %v566 = vmul.f32 %v402, %v554
      %v567 = vmul.f32 %v403, %v555
      %v568 = vmul.f32 %v404, %v554
      %v569 = vmul.f32 %v405, %v555
      %v570 = vmul.f32 %v406, %v554
      %v571 = vmul.f32 %v407, %v555
      %v572 = vpack.c.bf16 %v558, %v556
      %v573 = vpack.c.bf16 %v559, %v557
      %v574 = vpack.c.bf16 %v562, %v560
      %v575 = vpack.c.bf16 %v563, %v561
      %v576 = vpack.c.bf16 %v566, %v564
      %v577 = vpack.c.bf16 %v567, %v565
      %v578 = vpack.c.bf16 %v570, %v568
      %v579 = vpack.c.bf16 %v571, %v569
      %v580 = vmul.f32 %v463, %v554
      %v581 = vmul.f32 %v464, %v555
      %v582 = vmul.f32 %v465, %v554
      %v583 = vmul.f32 %v466, %v555
      %v584 = vmul.f32 %v467, %v554
      %v585 = vmul.f32 %v468, %v555
      %v586 = vmul.f32 %v469, %v554
      %v587 = vmul.f32 %v470, %v555
      %v588 = vmul.f32 %v471, %v554
      %v589 = vmul.f32 %v472, %v555
      %v590 = vmul.f32 %v473, %v554
      %v591 = vmul.f32 %v474, %v555
      %v592 = vmul.f32 %v475, %v554
      %v593 = vmul.f32 %v476, %v555
      %v594 = vmul.f32 %v477, %v554
      %v595 = vmul.f32 %v478, %v555
      %v596 = vpack.c.bf16 %v582, %v580
      %v597 = vpack.c.bf16 %v583, %v581
      %v598 = vpack.c.bf16 %v586, %v584
      %v599 = vpack.c.bf16 %v587, %v585
      %v600 = vpack.c.bf16 %v590, %v588
      %v601 = vpack.c.bf16 %v591, %v589
      %v602 = vpack.c.bf16 %v594, %v592
      %v603 = vpack.c.bf16 %v595, %v593
      %v604 = vpack.c.bf16 %v465, %v463
      %v605 = vpack.c.bf16 %v466, %v464
      %v606 = vpack.c.bf16 %v469, %v467
      %v607 = vpack.c.bf16 %v470, %v468
      %v608 = vpack.c.bf16 %v473, %v471
      %v609 = vpack.c.bf16 %v474, %v472
      %v610 = vpack.c.bf16 %v477, %v475
      %v611 = vpack.c.bf16 %v478, %v476
      %v612 = vpack.c.bf16 %v535, %v533
      %v613 = vpack.c.bf16 %v536, %v534
      %v614 = vpack.c.bf16 %v539, %v537
      %v615 = vpack.c.bf16 %v540, %v538
      %v616 = vpack.c.bf16 %v543, %v541
      %v617 = vpack.c.bf16 %v544, %v542
      %v618 = vpack.c.bf16 %v547, %v545
      %v619 = vpack.c.bf16 %v548, %v546
      %620 = vmatpush.bf16.xpose.msra.mxu0 0
      %621 = vmatpush.bf16.xpose.msra.mxu0 0
      %622 = vmatpush.bf16.xpose.msra.mxu0 0
      %623 = vmatpush.bf16.xpose.msra.mxu0 0
      %624 = vmatpush.bf16.xpose.msra.mxu0 %v610
      %625 = vmatpush.bf16.xpose.msra.mxu0 %v608
      %626 = vmatpush.bf16.xpose.msra.mxu0 %v606
      %627 = vmatpush.bf16.xpose.msra.mxu0 %v604
      %628 = vmatmul.bf16.gmra.mxu0 %v572
      %v629 = vpop.f32.mrf.mxu0
      %v630 = vadd.f32 0.0, %v629
      %v631 = vpop.f32.mrf.mxu0
      %v632 = vadd.f32 0.0, %v631
      %633 = vmatmul.bf16.gmra.mxu0 %v574
      %v634 = vpop.f32.mrf.mxu0
      %v635 = vadd.f32 0.0, %v634
      %v636 = vpop.f32.mrf.mxu0
      %v637 = vadd.f32 0.0, %v636
      %638 = vmatmul.bf16.gmra.mxu0 %v576
      %v639 = vpop.f32.mrf.mxu0
      %v640 = vadd.f32 0.0, %v639
      %v641 = vpop.f32.mrf.mxu0
      %v642 = vadd.f32 0.0, %v641
      %643 = vmatmul.bf16.gmra.mxu0 %v578
      %v644 = vpop.f32.mrf.mxu0
      %v645 = vadd.f32 0.0, %v644
      %v646 = vpop.f32.mrf.mxu0
      %v647 = vadd.f32 0.0, %v646
      %648 = vdwg.mxu0
      %649 = vmatpush.bf16.xpose.msra.mxu0 0
      %650 = vmatpush.bf16.xpose.msra.mxu0 0
      %651 = vmatpush.bf16.xpose.msra.mxu0 0
      %652 = vmatpush.bf16.xpose.msra.mxu0 0
      %653 = vmatpush.bf16.xpose.msra.mxu0 %v611
      %654 = vmatpush.bf16.xpose.msra.mxu0 %v609
      %655 = vmatpush.bf16.xpose.msra.mxu0 %v607
      %656 = vmatpush.bf16.xpose.msra.mxu0 %v605
      %657 = vmatmul.bf16.gmra.mxu0 %v573
      %v658 = vpop.f32.mrf.mxu0
      %v659 = vadd.f32 %v630, %v658
      %v660 = vpop.f32.mrf.mxu0
      %v661 = vadd.f32 %v632, %v660
      %662 = vmatmul.bf16.gmra.mxu0 %v575
      %v663 = vpop.f32.mrf.mxu0
      %v664 = vadd.f32 %v635, %v663
      %v665 = vpop.f32.mrf.mxu0
      %v666 = vadd.f32 %v637, %v665
      %667 = vmatmul.bf16.gmra.mxu0 %v577
      %v668 = vpop.f32.mrf.mxu0
      %v669 = vadd.f32 %v640, %v668
      %v670 = vpop.f32.mrf.mxu0
      %v671 = vadd.f32 %v642, %v670
      %672 = vmatmul.bf16.gmra.mxu0 %v579
      %v673 = vpop.f32.mrf.mxu0
      %v674 = vadd.f32 %v645, %v673
      %v675 = vpop.f32.mrf.mxu0
      %v676 = vadd.f32 %v647, %v675
      %677 = vdwg.mxu0
      %678 = vmatpush.bf16.xpose.msra.mxu0 0
      %679 = vmatpush.bf16.xpose.msra.mxu0 0
      %680 = vmatpush.bf16.xpose.msra.mxu0 0
      %681 = vmatpush.bf16.xpose.msra.mxu0 0
      %682 = vmatpush.bf16.xpose.msra.mxu0 %v618
      %683 = vmatpush.bf16.xpose.msra.mxu0 %v616
      %684 = vmatpush.bf16.xpose.msra.mxu0 %v614
      %685 = vmatpush.bf16.xpose.msra.mxu0 %v612
      %686 = vmatmul.bf16.gmra.mxu0 %v572
      %v687 = vpop.f32.mrf.mxu0
      %v688 = vadd.f32 0.0, %v687
      %v689 = vpop.f32.mrf.mxu0
      %v690 = vadd.f32 0.0, %v689
      %691 = vmatmul.bf16.gmra.mxu0 %v574
      %v692 = vpop.f32.mrf.mxu0
      %v693 = vadd.f32 0.0, %v692
      %v694 = vpop.f32.mrf.mxu0
      %v695 = vadd.f32 0.0, %v694
      %696 = vmatmul.bf16.gmra.mxu0 %v576
      %v697 = vpop.f32.mrf.mxu0
      %v698 = vadd.f32 0.0, %v697
      %v699 = vpop.f32.mrf.mxu0
      %v700 = vadd.f32 0.0, %v699
      %701 = vmatmul.bf16.gmra.mxu0 %v578
      %v702 = vpop.f32.mrf.mxu0
      %v703 = vadd.f32 0.0, %v702
      %v704 = vpop.f32.mrf.mxu0
      %v705 = vadd.f32 0.0, %v704
      %706 = vdwg.mxu0
      %707 = vmatpush.bf16.xpose.msra.mxu0 0
      %708 = vmatpush.bf16.xpose.msra.mxu0 0
      %709 = vmatpush.bf16.xpose.msra.mxu0 0
      %710 = vmatpush.bf16.xpose.msra.mxu0 0
      %711 = vmatpush.bf16.xpose.msra.mxu0 %v619
      %712 = vmatpush.bf16.xpose.msra.mxu0 %v617
      %713 = vmatpush.bf16.xpose.msra.mxu0 %v615
      %714 = vmatpush.bf16.xpose.msra.mxu0 %v613
      %715 = vmatmul.bf16.gmra.mxu0 %v573
      %v716 = vpop.f32.mrf.mxu0
      %v717 = vadd.f32 %v688, %v716
      %v718 = vpop.f32.mrf.mxu0
      %v719 = vadd.f32 %v690, %v718
      %720 = vmatmul.bf16.gmra.mxu0 %v575
      %v721 = vpop.f32.mrf.mxu0
      %v722 = vadd.f32 %v693, %v721
      %v723 = vpop.f32.mrf.mxu0
      %v724 = vadd.f32 %v695, %v723
      %725 = vmatmul.bf16.gmra.mxu0 %v577
      %v726 = vpop.f32.mrf.mxu0
      %v727 = vadd.f32 %v698, %v726
      %v728 = vpop.f32.mrf.mxu0
      %v729 = vadd.f32 %v700, %v728
      %730 = vmatmul.bf16.gmra.mxu0 %v579
      %v731 = vpop.f32.mrf.mxu0
      %v732 = vadd.f32 %v703, %v731
      %v733 = vpop.f32.mrf.mxu0
      %v734 = vadd.f32 %v705, %v733
      %735 = vdwg.mxu0
      %736 = vmatpush.bf16.xpose.msra.mxu0 0
      %737 = vmatpush.bf16.xpose.msra.mxu0 0
      %738 = vmatpush.bf16.xpose.msra.mxu0 0
      %739 = vmatpush.bf16.xpose.msra.mxu0 0
      %740 = vmatpush.bf16.xpose.msra.mxu0 %v618
      %741 = vmatpush.bf16.xpose.msra.mxu0 %v616
      %742 = vmatpush.bf16.xpose.msra.mxu0 %v614
      %743 = vmatpush.bf16.xpose.msra.mxu0 %v612
      %744 = vmatmul.bf16.gmra.mxu0 %v596
      %v745 = vpop.f32.mrf.mxu0
      %v746 = vadd.f32 0.0, %v745
      %v747 = vpop.f32.mrf.mxu0
      %v748 = vadd.f32 0.0, %v747
      %749 = vmatmul.bf16.gmra.mxu0 %v598
      %v750 = vpop.f32.mrf.mxu0
      %v751 = vadd.f32 0.0, %v750
      %v752 = vpop.f32.mrf.mxu0
      %v753 = vadd.f32 0.0, %v752
      %754 = vmatmul.bf16.gmra.mxu0 %v600
      %v755 = vpop.f32.mrf.mxu0
      %v756 = vadd.f32 0.0, %v755
      %v757 = vpop.f32.mrf.mxu0
      %v758 = vadd.f32 0.0, %v757
      %759 = vmatmul.bf16.gmra.mxu0 %v602
      %v760 = vpop.f32.mrf.mxu0
      %v761 = vadd.f32 0.0, %v760
      %v762 = vpop.f32.mrf.mxu0
      %v763 = vadd.f32 0.0, %v762
      %764 = vdwg.mxu0
      %765 = vmatpush.bf16.xpose.msra.mxu0 0
      %766 = vmatpush.bf16.xpose.msra.mxu0 0
      %767 = vmatpush.bf16.xpose.msra.mxu0 0
      %768 = vmatpush.bf16.xpose.msra.mxu0 0
      %769 = vmatpush.bf16.xpose.msra.mxu0 %v619
      %770 = vmatpush.bf16.xpose.msra.mxu0 %v617
      %771 = vmatpush.bf16.xpose.msra.mxu0 %v615
      %772 = vmatpush.bf16.xpose.msra.mxu0 %v613
      %773 = vmatmul.bf16.gmra.mxu0 %v597
      %v774 = vpop.f32.mrf.mxu0
      %v775 = vadd.f32 %v746, %v774
      %v776 = vpop.f32.mrf.mxu0
      %v777 = vadd.f32 %v748, %v776
      %778 = vmatmul.bf16.gmra.mxu0 %v599
      %v779 = vpop.f32.mrf.mxu0
      %v780 = vadd.f32 %v751, %v779
      %v781 = vpop.f32.mrf.mxu0
      %v782 = vadd.f32 %v753, %v781
      %783 = vmatmul.bf16.gmra.mxu0 %v601
      %v784 = vpop.f32.mrf.mxu0
      %v785 = vadd.f32 %v756, %v784
      %v786 = vpop.f32.mrf.mxu0
      %v787 = vadd.f32 %v758, %v786
      %788 = vmatmul.bf16.gmra.mxu0 %v603
      %v789 = vpop.f32.mrf.mxu0
      %v790 = vadd.f32 %v761, %v789
      %v791 = vpop.f32.mrf.mxu0
      %v792 = vadd.f32 %v763, %v791
      %793 = vdwg.mxu0
      %v794 = vld [vmem:[#allocation2] sm:$0xff]
      %v795 = vld [vmem:[#allocation2 + $0x8] sm:$0xff]
      %v796 = vld [vmem:[#allocation2 + $0x10] sm:$0xff]
      %v797 = vld [vmem:[#allocation2 + $0x18] sm:$0xff]
      %v798 = vld [vmem:[#allocation2 + $0x20] sm:$0xff]
      %v799 = vld [vmem:[#allocation2 + $0x28] sm:$0xff]
      %v800 = vld [vmem:[#allocation2 + $0x30] sm:$0xff]
      %v801 = vld [vmem:[#allocation2 + $0x38] sm:$0xff]
      %v802 = vadd.f32 %v794, %v659
      %v803 = vadd.f32 %v795, %v661
      %v804 = vadd.f32 %v796, %v664
      %v805 = vadd.f32 %v797, %v666
      %v806 = vadd.f32 %v798, %v669
      %v807 = vadd.f32 %v799, %v671
      %v808 = vadd.f32 %v800, %v674
      %v809 = vadd.f32 %v801, %v676
      %vm810 = vcmask 523264
      %811 = vst.msk [vmem:[#allocation2] sm:$0xff] %vm810, %v802
      %812 = vst.msk [vmem:[#allocation2 + $0x8] sm:$0xff] %vm810, %v803
      %813 = vst.msk [vmem:[#allocation2 + $0x10] sm:$0xff] %vm810, %v804
      %814 = vst.msk [vmem:[#allocation2 + $0x18] sm:$0xff] %vm810, %v805
      %815 = vst.msk [vmem:[#allocation2 + $0x20] sm:$0xff] %vm810, %v806
      %816 = vst.msk [vmem:[#allocation2 + $0x28] sm:$0xff] %vm810, %v807
      %817 = vst.msk [vmem:[#allocation2 + $0x30] sm:$0xff] %vm810, %v808
      %818 = vst.msk [vmem:[#allocation2 + $0x38] sm:$0xff] %vm810, %v809
      %s819 = scalar_lea.vmem [#allocation2], 64
      %v820 = vld [vmem:[%s819] sm:$0xff]
      %v821 = vld [vmem:[%s819 + $0x8] sm:$0xff]
      %v822 = vld [vmem:[%s819 + $0x10] sm:$0xff]
      %v823 = vld [vmem:[%s819 + $0x18] sm:$0xff]
      %v824 = vld [vmem:[%s819 + $0x20] sm:$0xff]
      %v825 = vld [vmem:[%s819 + $0x28] sm:$0xff]
      %v826 = vld [vmem:[%s819 + $0x30] sm:$0xff]
      %v827 = vld [vmem:[%s819 + $0x38] sm:$0xff]
      %v828 = vadd.f32 %v820, %v717
      %v829 = vadd.f32 %v821, %v719
      %v830 = vadd.f32 %v822, %v722
      %v831 = vadd.f32 %v823, %v724
      %v832 = vadd.f32 %v824, %v727
      %v833 = vadd.f32 %v825, %v729
      %v834 = vadd.f32 %v826, %v732
      %v835 = vadd.f32 %v827, %v734
      %836 = vst.msk [vmem:[%s819] sm:$0xff] %vm810, %v828
      %837 = vst.msk [vmem:[%s819 + $0x8] sm:$0xff] %vm810, %v829
      %838 = vst.msk [vmem:[%s819 + $0x10] sm:$0xff] %vm810, %v830
      %839 = vst.msk [vmem:[%s819 + $0x18] sm:$0xff] %vm810, %v831
      %840 = vst.msk [vmem:[%s819 + $0x20] sm:$0xff] %vm810, %v832
      %841 = vst.msk [vmem:[%s819 + $0x28] sm:$0xff] %vm810, %v833
      %842 = vst.msk [vmem:[%s819 + $0x30] sm:$0xff] %vm810, %v834
      %843 = vst.msk [vmem:[%s819 + $0x38] sm:$0xff] %vm810, %v835
      %s844 = scalar_lea.vmem [#allocation2], 128
      %v845 = vld [vmem:[%s844] sm:$0xff]
      %v846 = vld [vmem:[%s844 + $0x8] sm:$0xff]
      %v847 = vld [vmem:[%s844 + $0x10] sm:$0xff]
      %v848 = vld [vmem:[%s844 + $0x18] sm:$0xff]
      %v849 = vld [vmem:[%s844 + $0x20] sm:$0xff]
      %v850 = vld [vmem:[%s844 + $0x28] sm:$0xff]
      %v851 = vld [vmem:[%s844 + $0x30] sm:$0xff]
      %v852 = vld [vmem:[%s844 + $0x38] sm:$0xff]
      %v853 = vadd.f32 %v845, %v775
      %v854 = vadd.f32 %v846, %v777
      %v855 = vadd.f32 %v847, %v780
      %v856 = vadd.f32 %v848, %v782
      %v857 = vadd.f32 %v849, %v785
      %v858 = vadd.f32 %v850, %v787
      %v859 = vadd.f32 %v851, %v790
      %v860 = vadd.f32 %v852, %v792
      %861 = vst.msk [vmem:[%s844] sm:$0xff] %vm810, %v853
      %862 = vst.msk [vmem:[%s844 + $0x8] sm:$0xff] %vm810, %v854
      %863 = vst.msk [vmem:[%s844 + $0x10] sm:$0xff] %vm810, %v855
      %864 = vst.msk [vmem:[%s844 + $0x18] sm:$0xff] %vm810, %v856
      %865 = vst.msk [vmem:[%s844 + $0x20] sm:$0xff] %vm810, %v857
      %866 = vst.msk [vmem:[%s844 + $0x28] sm:$0xff] %vm810, %v858
      %867 = vst.msk [vmem:[%s844 + $0x30] sm:$0xff] %vm810, %v859
      %868 = vst.msk [vmem:[%s844 + $0x38] sm:$0xff] %vm810, %v860
      %v869 = vld [vmem:[%s199] sm:$0x77]
      %v870 = vmul.f32 %v869, %v869
      %v872 = vrot.slane %v870, 5
      %v873 = vrot.slane %v872, 4
      %v875 = vadd.f32 %v870, %v873
      %v876 = vrot.slane %v870, 6
      %v877 = vrot.slane %v876, 4
      %v879 = vadd.f32 %v875, %v877
      %v880 = vadd.f32 %v879, 0.025
      %v881 = vrsqrt.pop %v880
      %v882 = vmul.f32 %v881, %v880
      %v883 = vmul.f32 %v882, %v881
      %v884 = vmul.f32 0.5, %v883
      %v885 = vsub.f32 1.5, %v884
      %v886 = vmul.f32 %v881, %v885
      %v887 = vmul.f32 %v880, %v886
      %vm888 = vcmp.eq.f32.partialorder %v880, inf
      %v889 = vsel %vm888, %v880, %v887
      %vm890 = vcmp.eq.f32.partialorder %v880, 0.0
      %v891 = vand.u32 %v880, 2147483648
      %v892 = vsel %vm890, %v891, %v889
      %v893 = vadd.f32 %v869, 0.025
      %v894 = vlog2.pop %v893
      %v895 = vmul.f32 %v894, 0.6931472
      %v897 = vrot.slane %v895, 5
      %v898 = vrot.slane %v897, 4
      %v900 = vsub.f32 %v895, %v898
      %v901 = vmul.f32 %v900, 50.0
      %v902 = vrot.slane %v895, 6
      %v903 = vrot.slane %v902, 4
      %v905 = vsub.f32 %v895, %v903
      %v906 = vmul.f32 %v905, 50.0
      %v908 = vperm.slane %v901, 0
      %v909 = vperm.slane %v901, 4
      %v912 = vperm.slane %v908, 0
      %v913 = vperm.slane %v909, 0
      %v914 = vsub.f32 %v912, %v291
      %v915 = vsub.f32 %v913, %v291
      %v916 = vsub.f32 %v912, %v292
      %v917 = vsub.f32 %v913, %v292
      %v918 = vsub.f32 %v912, %v293
      %v919 = vsub.f32 %v913, %v293
      %v920 = vsub.f32 %v912, %v294
      %v921 = vsub.f32 %v913, %v294
      %v922 = vsub.f32 %v912, %v295
      %v923 = vsub.f32 %v913, %v295
      %v924 = vsub.f32 %v912, %v296
      %v925 = vsub.f32 %v913, %v296
      %v926 = vsub.f32 %v912, %v297
      %v927 = vsub.f32 %v913, %v297
      %v928 = vsub.f32 %v912, %v298
      %v929 = vsub.f32 %v913, %v298
      %v930 = vmul.f32 %v914, %v914
      %v931 = vmul.f32 %v915, %v915
      %v932 = vmul.f32 %v916, %v916
      %v933 = vmul.f32 %v917, %v917
      %v934 = vmul.f32 %v918, %v918
      %v935 = vmul.f32 %v919, %v919
      %v936 = vmul.f32 %v920, %v920
      %v937 = vmul.f32 %v921, %v921
      %v938 = vmul.f32 %v922, %v922
      %v939 = vmul.f32 %v923, %v923
      %v940 = vmul.f32 %v924, %v924
      %v941 = vmul.f32 %v925, %v925
      %v942 = vmul.f32 %v926, %v926
      %v943 = vmul.f32 %v927, %v927
      %v944 = vmul.f32 %v928, %v928
      %v945 = vmul.f32 %v929, %v929
      %v946 = vadd.f32 %v930, 1.0
      %v947 = vadd.f32 %v931, 1.0
      %v948 = vadd.f32 %v932, 1.0
      %v949 = vadd.f32 %v933, 1.0
      %v950 = vadd.f32 %v934, 1.0
      %v951 = vadd.f32 %v935, 1.0
      %v952 = vadd.f32 %v936, 1.0
      %v953 = vadd.f32 %v937, 1.0
      %v954 = vadd.f32 %v938, 1.0
      %v955 = vadd.f32 %v939, 1.0
      %v956 = vadd.f32 %v940, 1.0
      %v957 = vadd.f32 %v941, 1.0
      %v958 = vadd.f32 %v942, 1.0
      %v959 = vadd.f32 %v943, 1.0
      %v960 = vadd.f32 %v944, 1.0
      %v961 = vadd.f32 %v945, 1.0
      %v962 = vrcp.pop %v946
      %v963 = vrcp.pop %v947
      %v964 = vrcp.pop %v948
      %v965 = vrcp.pop %v949
      %v966 = vrcp.pop %v950
      %v967 = vrcp.pop %v951
      %v968 = vrcp.pop %v952
      %v969 = vrcp.pop %v953
      %v970 = vrcp.pop %v954
      %v971 = vrcp.pop %v955
      %v972 = vrcp.pop %v956
      %v973 = vrcp.pop %v957
      %v974 = vrcp.pop %v958
      %v975 = vrcp.pop %v959
      %v976 = vrcp.pop %v960
      %v977 = vrcp.pop %v961
      %v979 = vperm.slane %v906, 0
      %v980 = vperm.slane %v906, 4
      %v983 = vperm.slane %v979, 0
      %v984 = vperm.slane %v980, 0
      %v985 = vsub.f32 %v983, %v291
      %v986 = vsub.f32 %v984, %v291
      %v987 = vsub.f32 %v983, %v292
      %v988 = vsub.f32 %v984, %v292
      %v989 = vsub.f32 %v983, %v293
      %v990 = vsub.f32 %v984, %v293
      %v991 = vsub.f32 %v983, %v294
      %v992 = vsub.f32 %v984, %v294
      %v993 = vsub.f32 %v983, %v295
      %v994 = vsub.f32 %v984, %v295
      %v995 = vsub.f32 %v983, %v296
      %v996 = vsub.f32 %v984, %v296
      %v997 = vsub.f32 %v983, %v297
      %v998 = vsub.f32 %v984, %v297
      %v999 = vsub.f32 %v983, %v298
      %v1000 = vsub.f32 %v984, %v298
      %v1001 = vmul.f32 %v985, %v985
      %v1002 = vmul.f32 %v986, %v986
      %v1003 = vmul.f32 %v987, %v987
      %v1004 = vmul.f32 %v988, %v988
      %v1005 = vmul.f32 %v989, %v989
      %v1006 = vmul.f32 %v990, %v990
      %v1007 = vmul.f32 %v991, %v991
      %v1008 = vmul.f32 %v992, %v992
      %v1009 = vmul.f32 %v993, %v993
      %v1010 = vmul.f32 %v994, %v994
      %v1011 = vmul.f32 %v995, %v995
      %v1012 = vmul.f32 %v996, %v996
      %v1013 = vmul.f32 %v997, %v997
      %v1014 = vmul.f32 %v998, %v998
      %v1015 = vmul.f32 %v999, %v999
      %v1016 = vmul.f32 %v1000, %v1000
      %v1017 = vadd.f32 %v1001, 1.0
      %v1018 = vadd.f32 %v1002, 1.0
      %v1019 = vadd.f32 %v1003, 1.0
      %v1020 = vadd.f32 %v1004, 1.0
      %v1021 = vadd.f32 %v1005, 1.0
      %v1022 = vadd.f32 %v1006, 1.0
      %v1023 = vadd.f32 %v1007, 1.0
      %v1024 = vadd.f32 %v1008, 1.0
      %v1025 = vadd.f32 %v1009, 1.0
      %v1026 = vadd.f32 %v1010, 1.0
      %v1027 = vadd.f32 %v1011, 1.0
      %v1028 = vadd.f32 %v1012, 1.0
      %v1029 = vadd.f32 %v1013, 1.0
      %v1030 = vadd.f32 %v1014, 1.0
      %v1031 = vadd.f32 %v1015, 1.0
      %v1032 = vadd.f32 %v1016, 1.0
      %v1033 = vrcp.pop %v1017
      %v1034 = vrcp.pop %v1018
      %v1035 = vrcp.pop %v1019
      %v1036 = vrcp.pop %v1020
      %v1037 = vrcp.pop %v1021
      %v1038 = vrcp.pop %v1022
      %v1039 = vrcp.pop %v1023
      %v1040 = vrcp.pop %v1024
      %v1041 = vrcp.pop %v1025
      %v1042 = vrcp.pop %v1026
      %v1043 = vrcp.pop %v1027
      %v1044 = vrcp.pop %v1028
      %v1045 = vrcp.pop %v1029
      %v1046 = vrcp.pop %v1030
      %v1047 = vrcp.pop %v1031
      %v1048 = vrcp.pop %v1032
      %v1049 = vperm.slane %v901, 1
      %v1050 = vperm.slane %v901, 5
      %v1053 = vperm.slane %v1049, 1
      %v1054 = vperm.slane %v1050, 1
      %v1055 = vsub.f32 %v1053, %v291
      %v1056 = vsub.f32 %v1054, %v291
      %v1057 = vsub.f32 %v1053, %v292
      %v1058 = vsub.f32 %v1054, %v292
      %v1059 = vsub.f32 %v1053, %v293
      %v1060 = vsub.f32 %v1054, %v293
      %v1061 = vsub.f32 %v1053, %v294
      %v1062 = vsub.f32 %v1054, %v294
      %v1063 = vsub.f32 %v1053, %v295
      %v1064 = vsub.f32 %v1054, %v295
      %v1065 = vsub.f32 %v1053, %v296
      %v1066 = vsub.f32 %v1054, %v296
      %v1067 = vsub.f32 %v1053, %v297
      %v1068 = vsub.f32 %v1054, %v297
      %v1069 = vsub.f32 %v1053, %v298
      %v1070 = vsub.f32 %v1054, %v298
      %v1071 = vmul.f32 %v1055, %v1055
      %v1072 = vmul.f32 %v1056, %v1056
      %v1073 = vmul.f32 %v1057, %v1057
      %v1074 = vmul.f32 %v1058, %v1058
      %v1075 = vmul.f32 %v1059, %v1059
      %v1076 = vmul.f32 %v1060, %v1060
      %v1077 = vmul.f32 %v1061, %v1061
      %v1078 = vmul.f32 %v1062, %v1062
      %v1079 = vmul.f32 %v1063, %v1063
      %v1080 = vmul.f32 %v1064, %v1064
      %v1081 = vmul.f32 %v1065, %v1065
      %v1082 = vmul.f32 %v1066, %v1066
      %v1083 = vmul.f32 %v1067, %v1067
      %v1084 = vmul.f32 %v1068, %v1068
      %v1085 = vmul.f32 %v1069, %v1069
      %v1086 = vmul.f32 %v1070, %v1070
      %v1087 = vadd.f32 %v1071, 1.0
      %v1088 = vadd.f32 %v1072, 1.0
      %v1089 = vadd.f32 %v1073, 1.0
      %v1090 = vadd.f32 %v1074, 1.0
      %v1091 = vadd.f32 %v1075, 1.0
      %v1092 = vadd.f32 %v1076, 1.0
      %v1093 = vadd.f32 %v1077, 1.0
      %v1094 = vadd.f32 %v1078, 1.0
      %v1095 = vadd.f32 %v1079, 1.0
      %v1096 = vadd.f32 %v1080, 1.0
      %v1097 = vadd.f32 %v1081, 1.0
      %v1098 = vadd.f32 %v1082, 1.0
      %v1099 = vadd.f32 %v1083, 1.0
      %v1100 = vadd.f32 %v1084, 1.0
      %v1101 = vadd.f32 %v1085, 1.0
      %v1102 = vadd.f32 %v1086, 1.0
      %v1103 = vrcp.pop %v1087
      %v1104 = vrcp.pop %v1088
      %v1105 = vrcp.pop %v1089
      %v1106 = vrcp.pop %v1090
      %v1107 = vrcp.pop %v1091
      %v1108 = vrcp.pop %v1092
      %v1109 = vrcp.pop %v1093
      %v1110 = vrcp.pop %v1094
      %v1111 = vrcp.pop %v1095
      %v1112 = vrcp.pop %v1096
      %v1113 = vrcp.pop %v1097
      %v1114 = vrcp.pop %v1098
      %v1115 = vrcp.pop %v1099
      %v1116 = vrcp.pop %v1100
      %v1117 = vrcp.pop %v1101
      %v1118 = vrcp.pop %v1102
      %v1120 = vperm.slane %v892, 0
      %v1121 = vperm.slane %v892, 4
      %v1124 = vperm.slane %v1120, 0
      %v1125 = vperm.slane %v1121, 0
      %v1126 = vmul.f32 %v962, %v1124
      %v1127 = vmul.f32 %v963, %v1125
      %v1128 = vmul.f32 %v964, %v1124
      %v1129 = vmul.f32 %v965, %v1125
      %v1130 = vmul.f32 %v966, %v1124
      %v1131 = vmul.f32 %v967, %v1125
      %v1132 = vmul.f32 %v968, %v1124
      %v1133 = vmul.f32 %v969, %v1125
      %v1134 = vmul.f32 %v970, %v1124
      %v1135 = vmul.f32 %v971, %v1125
      %v1136 = vmul.f32 %v972, %v1124
      %v1137 = vmul.f32 %v973, %v1125
      %v1138 = vmul.f32 %v974, %v1124
      %v1139 = vmul.f32 %v975, %v1125
      %v1140 = vmul.f32 %v976, %v1124
      %v1141 = vmul.f32 %v977, %v1125
      %v1142 = vpack.c.bf16 %v1128, %v1126
      %v1143 = vpack.c.bf16 %v1129, %v1127
      %v1144 = vpack.c.bf16 %v1132, %v1130
      %v1145 = vpack.c.bf16 %v1133, %v1131
      %v1146 = vpack.c.bf16 %v1136, %v1134
      %v1147 = vpack.c.bf16 %v1137, %v1135
      %v1148 = vpack.c.bf16 %v1140, %v1138
      %v1149 = vpack.c.bf16 %v1141, %v1139
      %v1150 = vmul.f32 %v1033, %v1124
      %v1151 = vmul.f32 %v1034, %v1125
      %v1152 = vmul.f32 %v1035, %v1124
      %v1153 = vmul.f32 %v1036, %v1125
      %v1154 = vmul.f32 %v1037, %v1124
      %v1155 = vmul.f32 %v1038, %v1125
      %v1156 = vmul.f32 %v1039, %v1124
      %v1157 = vmul.f32 %v1040, %v1125
      %v1158 = vmul.f32 %v1041, %v1124
      %v1159 = vmul.f32 %v1042, %v1125
      %v1160 = vmul.f32 %v1043, %v1124
      %v1161 = vmul.f32 %v1044, %v1125
      %v1162 = vmul.f32 %v1045, %v1124
      %v1163 = vmul.f32 %v1046, %v1125
      %v1164 = vmul.f32 %v1047, %v1124
      %v1165 = vmul.f32 %v1048, %v1125
      %v1166 = vpack.c.bf16 %v1152, %v1150
      %v1167 = vpack.c.bf16 %v1153, %v1151
      %v1168 = vpack.c.bf16 %v1156, %v1154
      %v1169 = vpack.c.bf16 %v1157, %v1155
      %v1170 = vpack.c.bf16 %v1160, %v1158
      %v1171 = vpack.c.bf16 %v1161, %v1159
      %v1172 = vpack.c.bf16 %v1164, %v1162
      %v1173 = vpack.c.bf16 %v1165, %v1163
      %v1174 = vpack.c.bf16 %v1035, %v1033
      %v1175 = vpack.c.bf16 %v1036, %v1034
      %v1176 = vpack.c.bf16 %v1039, %v1037
      %v1177 = vpack.c.bf16 %v1040, %v1038
      %v1178 = vpack.c.bf16 %v1043, %v1041
      %v1179 = vpack.c.bf16 %v1044, %v1042
      %v1180 = vpack.c.bf16 %v1047, %v1045
      %v1181 = vpack.c.bf16 %v1048, %v1046
      %v1182 = vpack.c.bf16 %v1105, %v1103
      %v1183 = vpack.c.bf16 %v1106, %v1104
      %v1184 = vpack.c.bf16 %v1109, %v1107
      %v1185 = vpack.c.bf16 %v1110, %v1108
      %v1186 = vpack.c.bf16 %v1113, %v1111
      %v1187 = vpack.c.bf16 %v1114, %v1112
      %v1188 = vpack.c.bf16 %v1117, %v1115
      %v1189 = vpack.c.bf16 %v1118, %v1116
      %1190 = vmatpush.bf16.xpose.msra.mxu0 0
      %1191 = vmatpush.bf16.xpose.msra.mxu0 0
      %1192 = vmatpush.bf16.xpose.msra.mxu0 0
      %1193 = vmatpush.bf16.xpose.msra.mxu0 0
      %1194 = vmatpush.bf16.xpose.msra.mxu0 %v1180
      %1195 = vmatpush.bf16.xpose.msra.mxu0 %v1178
      %1196 = vmatpush.bf16.xpose.msra.mxu0 %v1176
      %1197 = vmatpush.bf16.xpose.msra.mxu0 %v1174
      %1198 = vmatmul.bf16.gmra.mxu0 %v1142
      %v1199 = vpop.f32.mrf.mxu0
      %v1200 = vadd.f32 0.0, %v1199
      %v1201 = vpop.f32.mrf.mxu0
      %v1202 = vadd.f32 0.0, %v1201
      %1203 = vmatmul.bf16.gmra.mxu0 %v1144
      %v1204 = vpop.f32.mrf.mxu0
      %v1205 = vadd.f32 0.0, %v1204
      %v1206 = vpop.f32.mrf.mxu0
      %v1207 = vadd.f32 0.0, %v1206
      %1208 = vmatmul.bf16.gmra.mxu0 %v1146
      %v1209 = vpop.f32.mrf.mxu0
      %v1210 = vadd.f32 0.0, %v1209
      %v1211 = vpop.f32.mrf.mxu0
      %v1212 = vadd.f32 0.0, %v1211
      %1213 = vmatmul.bf16.gmra.mxu0 %v1148
      %v1214 = vpop.f32.mrf.mxu0
      %v1215 = vadd.f32 0.0, %v1214
      %v1216 = vpop.f32.mrf.mxu0
      %v1217 = vadd.f32 0.0, %v1216
      %1218 = vdwg.mxu0
      %1219 = vmatpush.bf16.xpose.msra.mxu0 0
      %1220 = vmatpush.bf16.xpose.msra.mxu0 0
      %1221 = vmatpush.bf16.xpose.msra.mxu0 0
      %1222 = vmatpush.bf16.xpose.msra.mxu0 0
      %1223 = vmatpush.bf16.xpose.msra.mxu0 %v1181
      %1224 = vmatpush.bf16.xpose.msra.mxu0 %v1179
      %1225 = vmatpush.bf16.xpose.msra.mxu0 %v1177
      %1226 = vmatpush.bf16.xpose.msra.mxu0 %v1175
      %1227 = vmatmul.bf16.gmra.mxu0 %v1143
      %v1228 = vpop.f32.mrf.mxu0
      %v1229 = vadd.f32 %v1200, %v1228
      %v1230 = vpop.f32.mrf.mxu0
      %v1231 = vadd.f32 %v1202, %v1230
      %1232 = vmatmul.bf16.gmra.mxu0 %v1145
      %v1233 = vpop.f32.mrf.mxu0
      %v1234 = vadd.f32 %v1205, %v1233
      %v1235 = vpop.f32.mrf.mxu0
      %v1236 = vadd.f32 %v1207, %v1235
      %1237 = vmatmul.bf16.gmra.mxu0 %v1147
      %v1238 = vpop.f32.mrf.mxu0
      %v1239 = vadd.f32 %v1210, %v1238
      %v1240 = vpop.f32.mrf.mxu0
      %v1241 = vadd.f32 %v1212, %v1240
      %1242 = vmatmul.bf16.gmra.mxu0 %v1149
      %v1243 = vpop.f32.mrf.mxu0
      %v1244 = vadd.f32 %v1215, %v1243
      %v1245 = vpop.f32.mrf.mxu0
      %v1246 = vadd.f32 %v1217, %v1245
      %1247 = vdwg.mxu0
      %1248 = vmatpush.bf16.xpose.msra.mxu0 0
      %1249 = vmatpush.bf16.xpose.msra.mxu0 0
      %1250 = vmatpush.bf16.xpose.msra.mxu0 0
      %1251 = vmatpush.bf16.xpose.msra.mxu0 0
      %1252 = vmatpush.bf16.xpose.msra.mxu0 %v1188
      %1253 = vmatpush.bf16.xpose.msra.mxu0 %v1186
      %1254 = vmatpush.bf16.xpose.msra.mxu0 %v1184
      %1255 = vmatpush.bf16.xpose.msra.mxu0 %v1182
      %1256 = vmatmul.bf16.gmra.mxu0 %v1142
      %v1257 = vpop.f32.mrf.mxu0
      %v1258 = vadd.f32 0.0, %v1257
      %v1259 = vpop.f32.mrf.mxu0
      %v1260 = vadd.f32 0.0, %v1259
      %1261 = vmatmul.bf16.gmra.mxu0 %v1144
      %v1262 = vpop.f32.mrf.mxu0
      %v1263 = vadd.f32 0.0, %v1262
      %v1264 = vpop.f32.mrf.mxu0
      %v1265 = vadd.f32 0.0, %v1264
      %1266 = vmatmul.bf16.gmra.mxu0 %v1146
      %v1267 = vpop.f32.mrf.mxu0
      %v1268 = vadd.f32 0.0, %v1267
      %v1269 = vpop.f32.mrf.mxu0
      %v1270 = vadd.f32 0.0, %v1269
      %1271 = vmatmul.bf16.gmra.mxu0 %v1148
      %v1272 = vpop.f32.mrf.mxu0
      %v1273 = vadd.f32 0.0, %v1272
      %v1274 = vpop.f32.mrf.mxu0
      %v1275 = vadd.f32 0.0, %v1274
      %1276 = vdwg.mxu0
      %1277 = vmatpush.bf16.xpose.msra.mxu0 0
      %1278 = vmatpush.bf16.xpose.msra.mxu0 0
      %1279 = vmatpush.bf16.xpose.msra.mxu0 0
      %1280 = vmatpush.bf16.xpose.msra.mxu0 0
      %1281 = vmatpush.bf16.xpose.msra.mxu0 %v1189
      %1282 = vmatpush.bf16.xpose.msra.mxu0 %v1187
      %1283 = vmatpush.bf16.xpose.msra.mxu0 %v1185
      %1284 = vmatpush.bf16.xpose.msra.mxu0 %v1183
      %1285 = vmatmul.bf16.gmra.mxu0 %v1143
      %v1286 = vpop.f32.mrf.mxu0
      %v1287 = vadd.f32 %v1258, %v1286
      %v1288 = vpop.f32.mrf.mxu0
      %v1289 = vadd.f32 %v1260, %v1288
      %1290 = vmatmul.bf16.gmra.mxu0 %v1145
      %v1291 = vpop.f32.mrf.mxu0
      %v1292 = vadd.f32 %v1263, %v1291
      %v1293 = vpop.f32.mrf.mxu0
      %v1294 = vadd.f32 %v1265, %v1293
      %1295 = vmatmul.bf16.gmra.mxu0 %v1147
      %v1296 = vpop.f32.mrf.mxu0
      %v1297 = vadd.f32 %v1268, %v1296
      %v1298 = vpop.f32.mrf.mxu0
      %v1299 = vadd.f32 %v1270, %v1298
      %1300 = vmatmul.bf16.gmra.mxu0 %v1149
      %v1301 = vpop.f32.mrf.mxu0
      %v1302 = vadd.f32 %v1273, %v1301
      %v1303 = vpop.f32.mrf.mxu0
      %v1304 = vadd.f32 %v1275, %v1303
      %1305 = vdwg.mxu0
      %1306 = vmatpush.bf16.xpose.msra.mxu0 0
      %1307 = vmatpush.bf16.xpose.msra.mxu0 0
      %1308 = vmatpush.bf16.xpose.msra.mxu0 0
      %1309 = vmatpush.bf16.xpose.msra.mxu0 0
      %1310 = vmatpush.bf16.xpose.msra.mxu0 %v1188
      %1311 = vmatpush.bf16.xpose.msra.mxu0 %v1186
      %1312 = vmatpush.bf16.xpose.msra.mxu0 %v1184
      %1313 = vmatpush.bf16.xpose.msra.mxu0 %v1182
      %1314 = vmatmul.bf16.gmra.mxu0 %v1166
      %v1315 = vpop.f32.mrf.mxu0
      %v1316 = vadd.f32 0.0, %v1315
      %v1317 = vpop.f32.mrf.mxu0
      %v1318 = vadd.f32 0.0, %v1317
      %1319 = vmatmul.bf16.gmra.mxu0 %v1168
      %v1320 = vpop.f32.mrf.mxu0
      %v1321 = vadd.f32 0.0, %v1320
      %v1322 = vpop.f32.mrf.mxu0
      %v1323 = vadd.f32 0.0, %v1322
      %1324 = vmatmul.bf16.gmra.mxu0 %v1170
      %v1325 = vpop.f32.mrf.mxu0
      %v1326 = vadd.f32 0.0, %v1325
      %v1327 = vpop.f32.mrf.mxu0
      %v1328 = vadd.f32 0.0, %v1327
      %1329 = vmatmul.bf16.gmra.mxu0 %v1172
      %v1330 = vpop.f32.mrf.mxu0
      %v1331 = vadd.f32 0.0, %v1330
      %v1332 = vpop.f32.mrf.mxu0
      %v1333 = vadd.f32 0.0, %v1332
      %1334 = vdwg.mxu0
      %1335 = vmatpush.bf16.xpose.msra.mxu0 0
      %1336 = vmatpush.bf16.xpose.msra.mxu0 0
      %1337 = vmatpush.bf16.xpose.msra.mxu0 0
      %1338 = vmatpush.bf16.xpose.msra.mxu0 0
      %1339 = vmatpush.bf16.xpose.msra.mxu0 %v1189
      %1340 = vmatpush.bf16.xpose.msra.mxu0 %v1187
      %1341 = vmatpush.bf16.xpose.msra.mxu0 %v1185
      %1342 = vmatpush.bf16.xpose.msra.mxu0 %v1183
      %1343 = vmatmul.bf16.gmra.mxu0 %v1167
      %v1344 = vpop.f32.mrf.mxu0
      %v1345 = vadd.f32 %v1316, %v1344
      %v1346 = vpop.f32.mrf.mxu0
      %v1347 = vadd.f32 %v1318, %v1346
      %1348 = vmatmul.bf16.gmra.mxu0 %v1169
      %v1349 = vpop.f32.mrf.mxu0
      %v1350 = vadd.f32 %v1321, %v1349
      %v1351 = vpop.f32.mrf.mxu0
      %v1352 = vadd.f32 %v1323, %v1351
      %1353 = vmatmul.bf16.gmra.mxu0 %v1171
      %v1354 = vpop.f32.mrf.mxu0
      %v1355 = vadd.f32 %v1326, %v1354
      %v1356 = vpop.f32.mrf.mxu0
      %v1357 = vadd.f32 %v1328, %v1356
      %1358 = vmatmul.bf16.gmra.mxu0 %v1173
      %v1359 = vpop.f32.mrf.mxu0
      %v1360 = vadd.f32 %v1331, %v1359
      %v1361 = vpop.f32.mrf.mxu0
      %v1362 = vadd.f32 %v1333, %v1361
      %1363 = vdwg.mxu0
      %v1364 = vld [vmem:[#allocation3] sm:$0xff]
      %v1365 = vld [vmem:[#allocation3 + $0x8] sm:$0xff]
      %v1366 = vld [vmem:[#allocation3 + $0x10] sm:$0xff]
      %v1367 = vld [vmem:[#allocation3 + $0x18] sm:$0xff]
      %v1368 = vld [vmem:[#allocation3 + $0x20] sm:$0xff]
      %v1369 = vld [vmem:[#allocation3 + $0x28] sm:$0xff]
      %v1370 = vld [vmem:[#allocation3 + $0x30] sm:$0xff]
      %v1371 = vld [vmem:[#allocation3 + $0x38] sm:$0xff]
      %v1372 = vadd.f32 %v1364, %v1229
      %v1373 = vadd.f32 %v1365, %v1231
      %v1374 = vadd.f32 %v1366, %v1234
      %v1375 = vadd.f32 %v1367, %v1236
      %v1376 = vadd.f32 %v1368, %v1239
      %v1377 = vadd.f32 %v1369, %v1241
      %v1378 = vadd.f32 %v1370, %v1244
      %v1379 = vadd.f32 %v1371, %v1246
      %1380 = vst.msk [vmem:[#allocation3] sm:$0xff] %vm810, %v1372
      %1381 = vst.msk [vmem:[#allocation3 + $0x8] sm:$0xff] %vm810, %v1373
      %1382 = vst.msk [vmem:[#allocation3 + $0x10] sm:$0xff] %vm810, %v1374
      %1383 = vst.msk [vmem:[#allocation3 + $0x18] sm:$0xff] %vm810, %v1375
      %1384 = vst.msk [vmem:[#allocation3 + $0x20] sm:$0xff] %vm810, %v1376
      %1385 = vst.msk [vmem:[#allocation3 + $0x28] sm:$0xff] %vm810, %v1377
      %1386 = vst.msk [vmem:[#allocation3 + $0x30] sm:$0xff] %vm810, %v1378
      %1387 = vst.msk [vmem:[#allocation3 + $0x38] sm:$0xff] %vm810, %v1379
      %s1388 = scalar_lea.vmem [#allocation3], 64
      %v1389 = vld [vmem:[%s1388] sm:$0xff]
      %v1390 = vld [vmem:[%s1388 + $0x8] sm:$0xff]
      %v1391 = vld [vmem:[%s1388 + $0x10] sm:$0xff]
      %v1392 = vld [vmem:[%s1388 + $0x18] sm:$0xff]
      %v1393 = vld [vmem:[%s1388 + $0x20] sm:$0xff]
      %v1394 = vld [vmem:[%s1388 + $0x28] sm:$0xff]
      %v1395 = vld [vmem:[%s1388 + $0x30] sm:$0xff]
      %v1396 = vld [vmem:[%s1388 + $0x38] sm:$0xff]
      %v1397 = vadd.f32 %v1389, %v1287
      %v1398 = vadd.f32 %v1390, %v1289
      %v1399 = vadd.f32 %v1391, %v1292
      %v1400 = vadd.f32 %v1392, %v1294
      %v1401 = vadd.f32 %v1393, %v1297
      %v1402 = vadd.f32 %v1394, %v1299
      %v1403 = vadd.f32 %v1395, %v1302
      %v1404 = vadd.f32 %v1396, %v1304
      %1405 = vst.msk [vmem:[%s1388] sm:$0xff] %vm810, %v1397
      %1406 = vst.msk [vmem:[%s1388 + $0x8] sm:$0xff] %vm810, %v1398
      %1407 = vst.msk [vmem:[%s1388 + $0x10] sm:$0xff] %vm810, %v1399
      %1408 = vst.msk [vmem:[%s1388 + $0x18] sm:$0xff] %vm810, %v1400
      %1409 = vst.msk [vmem:[%s1388 + $0x20] sm:$0xff] %vm810, %v1401
      %1410 = vst.msk [vmem:[%s1388 + $0x28] sm:$0xff] %vm810, %v1402
      %1411 = vst.msk [vmem:[%s1388 + $0x30] sm:$0xff] %vm810, %v1403
      %1412 = vst.msk [vmem:[%s1388 + $0x38] sm:$0xff] %vm810, %v1404
      %s1413 = scalar_lea.vmem [#allocation3], 128
      %v1414 = vld [vmem:[%s1413] sm:$0xff]
      %v1415 = vld [vmem:[%s1413 + $0x8] sm:$0xff]
      %v1416 = vld [vmem:[%s1413 + $0x10] sm:$0xff]
      %v1417 = vld [vmem:[%s1413 + $0x18] sm:$0xff]
      %v1418 = vld [vmem:[%s1413 + $0x20] sm:$0xff]
      %v1419 = vld [vmem:[%s1413 + $0x28] sm:$0xff]
      %v1420 = vld [vmem:[%s1413 + $0x30] sm:$0xff]
      %v1421 = vld [vmem:[%s1413 + $0x38] sm:$0xff]
      %v1422 = vadd.f32 %v1414, %v1345
      %v1423 = vadd.f32 %v1415, %v1347
      %v1424 = vadd.f32 %v1416, %v1350
      %v1425 = vadd.f32 %v1417, %v1352
      %v1426 = vadd.f32 %v1418, %v1355
      %v1427 = vadd.f32 %v1419, %v1357
      %v1428 = vadd.f32 %v1420, %v1360
      %v1429 = vadd.f32 %v1421, %v1362
      %1430 = vst.msk [vmem:[%s1413] sm:$0xff] %vm810, %v1422
      %1431 = vst.msk [vmem:[%s1413 + $0x8] sm:$0xff] %vm810, %v1423
      %1432 = vst.msk [vmem:[%s1413 + $0x10] sm:$0xff] %vm810, %v1424
      %1433 = vst.msk [vmem:[%s1413 + $0x18] sm:$0xff] %vm810, %v1425
      %1434 = vst.msk [vmem:[%s1413 + $0x20] sm:$0xff] %vm810, %v1426
      %1435 = vst.msk [vmem:[%s1413 + $0x28] sm:$0xff] %vm810, %v1427
      %1436 = vst.msk [vmem:[%s1413 + $0x30] sm:$0xff] %vm810, %v1428
      %1437 = vst.msk [vmem:[%s1413 + $0x38] sm:$0xff] %vm810, %v1429
      // Predicated region
      $region33: #{tpu_custom_call.1} parent=27 // pred_check
        %p1438 = pneg %p205
      $region34: #{tpu_custom_call.1} parent=27 // pred_check_branch
        %1440 = sbr.rel (%p1438) target = $region36
      $region35: #{tpu_custom_call.1} parent=27 // pred_region
        %v1441 = vld [vmem:[#allocation2] sm:$0xff]
        %v1442 = vld [vmem:[#allocation2 + $0x8] sm:$0xff]
        %v1443 = vld [vmem:[#allocation2 + $0x10] sm:$0xff]
        %v1444 = vld [vmem:[#allocation2 + $0x18] sm:$0xff]
        %v1445 = vld [vmem:[#allocation2 + $0x20] sm:$0xff]
        %v1446 = vld [vmem:[#allocation2 + $0x28] sm:$0xff]
        %v1447 = vld [vmem:[#allocation2 + $0x30] sm:$0xff]
        %v1448 = vld [vmem:[#allocation2 + $0x38] sm:$0xff]
        %v1449 = vld [vmem:[#allocation2 + $0x40] sm:$0xff]
        %v1450 = vld [vmem:[#allocation2 + $0x48] sm:$0xff]
        %v1451 = vld [vmem:[#allocation2 + $0x50] sm:$0xff]
        %v1452 = vld [vmem:[#allocation2 + $0x58] sm:$0xff]
        %v1453 = vld [vmem:[#allocation2 + $0x60] sm:$0xff]
        %v1454 = vld [vmem:[#allocation2 + $0x68] sm:$0xff]
        %v1455 = vld [vmem:[#allocation2 + $0x70] sm:$0xff]
        %v1456 = vld [vmem:[#allocation2 + $0x78] sm:$0xff]
        %v1457 = vld [vmem:[#allocation2 + $0x80] sm:$0xff]
        %v1458 = vld [vmem:[#allocation2 + $0x88] sm:$0xff]
        %v1459 = vld [vmem:[#allocation2 + $0x90] sm:$0xff]
        %v1460 = vld [vmem:[#allocation2 + $0x98] sm:$0xff]
        %v1461 = vld [vmem:[#allocation2 + $0xa0] sm:$0xff]
        %v1462 = vld [vmem:[#allocation2 + $0xa8] sm:$0xff]
        %v1463 = vld [vmem:[#allocation2 + $0xb0] sm:$0xff]
        %v1464 = vld [vmem:[#allocation2 + $0xb8] sm:$0xff]
        %v1465 = vld [vmem:[#allocation3] sm:$0xff]
        %v1466 = vld [vmem:[#allocation3 + $0x8] sm:$0xff]
        %v1467 = vld [vmem:[#allocation3 + $0x10] sm:$0xff]
        %v1468 = vld [vmem:[#allocation3 + $0x18] sm:$0xff]
        %v1469 = vld [vmem:[#allocation3 + $0x20] sm:$0xff]
        %v1470 = vld [vmem:[#allocation3 + $0x28] sm:$0xff]
        %v1471 = vld [vmem:[#allocation3 + $0x30] sm:$0xff]
        %v1472 = vld [vmem:[#allocation3 + $0x38] sm:$0xff]
        %v1473 = vld [vmem:[#allocation3 + $0x40] sm:$0xff]
        %v1474 = vld [vmem:[#allocation3 + $0x48] sm:$0xff]
        %v1475 = vld [vmem:[#allocation3 + $0x50] sm:$0xff]
        %v1476 = vld [vmem:[#allocation3 + $0x58] sm:$0xff]
        %v1477 = vld [vmem:[#allocation3 + $0x60] sm:$0xff]
        %v1478 = vld [vmem:[#allocation3 + $0x68] sm:$0xff]
        %v1479 = vld [vmem:[#allocation3 + $0x70] sm:$0xff]
        %v1480 = vld [vmem:[#allocation3 + $0x78] sm:$0xff]
        %v1481 = vld [vmem:[#allocation3 + $0x80] sm:$0xff]
        %v1482 = vld [vmem:[#allocation3 + $0x88] sm:$0xff]
        %v1483 = vld [vmem:[#allocation3 + $0x90] sm:$0xff]
        %v1484 = vld [vmem:[#allocation3 + $0x98] sm:$0xff]
        %v1485 = vld [vmem:[#allocation3 + $0xa0] sm:$0xff]
        %v1486 = vld [vmem:[#allocation3 + $0xa8] sm:$0xff]
        %v1487 = vld [vmem:[#allocation3 + $0xb0] sm:$0xff]
        %v1488 = vld [vmem:[#allocation3 + $0xb8] sm:$0xff]
        %v1489 = vsel %vm810, %v1441, 0.0
        %v1490 = vsel %vm810, %v1442, 0.0
        %v1491 = vadd.f32 %v1489, %v1490
        %v1492 = vsel %vm810, %v1443, 0.0
        %v1493 = vadd.f32 %v1491, %v1492
        %v1494 = vsel %vm810, %v1444, 0.0
        %v1495 = vadd.f32 %v1493, %v1494
        %v1496 = vsel %vm810, %v1445, 0.0
        %v1497 = vadd.f32 %v1495, %v1496
        %v1498 = vsel %vm810, %v1446, 0.0
        %v1499 = vadd.f32 %v1497, %v1498
        %v1500 = vsel %vm810, %v1447, 0.0
        %v1501 = vadd.f32 %v1499, %v1500
        %v1502 = vsel %vm810, %v1448, 0.0
        %v1503 = vadd.f32 %v1501, %v1502
        %v1504 = vsel %vm810, %v1449, 0.0
        %v1505 = vadd.f32 %v1503, %v1504
        %v1506 = vsel %vm810, %v1450, 0.0
        %v1507 = vadd.f32 %v1505, %v1506
        %v1508 = vsel %vm810, %v1451, 0.0
        %v1509 = vadd.f32 %v1507, %v1508
        %v1510 = vsel %vm810, %v1452, 0.0
        %v1511 = vadd.f32 %v1509, %v1510
        %v1512 = vsel %vm810, %v1453, 0.0
        %v1513 = vadd.f32 %v1511, %v1512
        %v1514 = vsel %vm810, %v1454, 0.0
        %v1515 = vadd.f32 %v1513, %v1514
        %v1516 = vsel %vm810, %v1455, 0.0
        %v1517 = vadd.f32 %v1515, %v1516
        %v1518 = vsel %vm810, %v1456, 0.0
        %v1519 = vadd.f32 %v1517, %v1518
        %v1520 = vsel %vm810, %v1457, 0.0
        %v1521 = vadd.f32 %v1519, %v1520
        %v1522 = vsel %vm810, %v1458, 0.0
        %v1523 = vadd.f32 %v1521, %v1522
        %v1524 = vsel %vm810, %v1459, 0.0
        %v1525 = vadd.f32 %v1523, %v1524
        %v1526 = vsel %vm810, %v1460, 0.0
        %v1527 = vadd.f32 %v1525, %v1526
        %v1528 = vsel %vm810, %v1461, 0.0
        %v1529 = vadd.f32 %v1527, %v1528
        %v1530 = vsel %vm810, %v1462, 0.0
        %v1531 = vadd.f32 %v1529, %v1530
        %v1532 = vsel %vm810, %v1463, 0.0
        %v1533 = vadd.f32 %v1531, %v1532
        %v1534 = vsel %vm810, %v1464, 0.0
        %v1535 = vadd.f32 %v1533, %v1534
        %1536 = vadd.xlane.f32.xlu0 %v1535
        %v1537 = vpop.xlane.xlu0 %1536
        %v1538 = vrot.slane %v1537, 4
        %v1539 = vadd.f32 %v1537, %v1538
        %v1540 = vrot.slane %v1539, 2
        %v1541 = vadd.f32 %v1539, %v1540
        %v1542 = vrot.slane %v1541, 1
        %v1543 = vadd.f32 %v1541, %v1542
        %s1544 = vtos %v1543
        %s1545 = sadd.f32 %s1544, 0.025
        %v1546 = vstv %s1545
        %v1547 = vrsqrt.pop %v1546
        %v1548 = vmul.f32 %v1547, %v1546
        %v1549 = vmul.f32 %v1548, %v1547
        %v1550 = vmul.f32 0.5, %v1549
        %v1551 = vsub.f32 1.5, %v1550
        %v1552 = vmul.f32 %v1547, %v1551
        %vm1553 = vweird.f32 %v1546
        %vm1554 = vweird.f32 %v1547
        %vm1555 = vmor %vm1553, %vm1554
        %v1556 = vsel %vm1555, %v1547, %v1552
        %s1557 = vtos %v1556
        %v1558 = vsel %vm810, %v1465, 0.0
        %v1559 = vsel %vm810, %v1466, 0.0
        %v1560 = vadd.f32 %v1558, %v1559
        %v1561 = vsel %vm810, %v1467, 0.0
        %v1562 = vadd.f32 %v1560, %v1561
        %v1563 = vsel %vm810, %v1468, 0.0
        %v1564 = vadd.f32 %v1562, %v1563
        %v1565 = vsel %vm810, %v1469, 0.0
        %v1566 = vadd.f32 %v1564, %v1565
        %v1567 = vsel %vm810, %v1470, 0.0
        %v1568 = vadd.f32 %v1566, %v1567
        %v1569 = vsel %vm810, %v1471, 0.0
        %v1570 = vadd.f32 %v1568, %v1569
        %v1571 = vsel %vm810, %v1472, 0.0
        %v1572 = vadd.f32 %v1570, %v1571
        %v1573 = vsel %vm810, %v1473, 0.0
        %v1574 = vadd.f32 %v1572, %v1573
        %v1575 = vsel %vm810, %v1474, 0.0
        %v1576 = vadd.f32 %v1574, %v1575
        %v1577 = vsel %vm810, %v1475, 0.0
        %v1578 = vadd.f32 %v1576, %v1577
        %v1579 = vsel %vm810, %v1476, 0.0
        %v1580 = vadd.f32 %v1578, %v1579
        %v1581 = vsel %vm810, %v1477, 0.0
        %v1582 = vadd.f32 %v1580, %v1581
        %v1583 = vsel %vm810, %v1478, 0.0
        %v1584 = vadd.f32 %v1582, %v1583
        %v1585 = vsel %vm810, %v1479, 0.0
        %v1586 = vadd.f32 %v1584, %v1585
        %v1587 = vsel %vm810, %v1480, 0.0
        %v1588 = vadd.f32 %v1586, %v1587
        %v1589 = vsel %vm810, %v1481, 0.0
        %v1590 = vadd.f32 %v1588, %v1589
        %v1591 = vsel %vm810, %v1482, 0.0
        %v1592 = vadd.f32 %v1590, %v1591
        %v1593 = vsel %vm810, %v1483, 0.0
        %v1594 = vadd.f32 %v1592, %v1593
        %v1595 = vsel %vm810, %v1484, 0.0
        %v1596 = vadd.f32 %v1594, %v1595
        %v1597 = vsel %vm810, %v1485, 0.0
        %v1598 = vadd.f32 %v1596, %v1597
        %v1599 = vsel %vm810, %v1486, 0.0
        %v1600 = vadd.f32 %v1598, %v1599
        %v1601 = vsel %vm810, %v1487, 0.0
        %v1602 = vadd.f32 %v1600, %v1601
        %v1603 = vsel %vm810, %v1488, 0.0
        %v1604 = vadd.f32 %v1602, %v1603
        %1605 = vadd.xlane.f32.xlu0 %v1604
        %v1606 = vpop.xlane.xlu0 %1605
        %v1607 = vrot.slane %v1606, 4
        %v1608 = vadd.f32 %v1606, %v1607
        %v1609 = vrot.slane %v1608, 2
        %v1610 = vadd.f32 %v1608, %v1609
        %v1611 = vrot.slane %v1610, 1
        %v1612 = vadd.f32 %v1610, %v1611
        %s1613 = vtos %v1612
        %s1614 = sadd.f32 %s1613, 0.025
        %v1615 = vstv %s1614
        %v1616 = vrsqrt.pop %v1615
        %v1617 = vmul.f32 %v1616, %v1615
        %v1618 = vmul.f32 %v1617, %v1616
        %v1619 = vmul.f32 0.5, %v1618
        %v1620 = vsub.f32 1.5, %v1619
        %v1621 = vmul.f32 %v1616, %v1620
        %vm1622 = vweird.f32 %v1615
        %vm1623 = vweird.f32 %v1616
        %vm1624 = vmor %vm1622, %vm1623
        %v1625 = vsel %vm1624, %v1616, %v1621
        %s1626 = vtos %v1625
        %v1627 = vrsqrt.pop %v1465
        %v1628 = vmul.f32 %v1627, %v1465
        %v1629 = vmul.f32 %v1628, %v1627
        %v1630 = vmul.f32 0.5, %v1629
        %v1631 = vsub.f32 1.5, %v1630
        %v1632 = vmul.f32 %v1627, %v1631
        %v1633 = vmul.f32 %v1465, %v1632
        %vm1634 = vcmp.eq.f32.partialorder %v1465, inf
        %v1635 = vsel %vm1634, %v1465, %v1633
        %vm1636 = vcmp.eq.f32.partialorder %v1465, 0.0
        %v1637 = vand.u32 %v1465, 2147483648
        %v1638 = vsel %vm1636, %v1637, %v1635
        %v1639 = vrsqrt.pop %v1466
        %v1640 = vmul.f32 %v1639, %v1466
        %v1641 = vmul.f32 %v1640, %v1639
        %v1642 = vmul.f32 0.5, %v1641
        %v1643 = vsub.f32 1.5, %v1642
        %v1644 = vmul.f32 %v1639, %v1643
        %v1645 = vmul.f32 %v1466, %v1644
        %vm1646 = vcmp.eq.f32.partialorder %v1466, inf
        %v1647 = vsel %vm1646, %v1466, %v1645
        %vm1648 = vcmp.eq.f32.partialorder %v1466, 0.0
        %v1649 = vand.u32 %v1466, 2147483648
        %v1650 = vsel %vm1648, %v1649, %v1647
        %v1651 = vrsqrt.pop %v1467
        %v1652 = vmul.f32 %v1651, %v1467
        %v1653 = vmul.f32 %v1652, %v1651
        %v1654 = vmul.f32 0.5, %v1653
        %v1655 = vsub.f32 1.5, %v1654
        %v1656 = vmul.f32 %v1651, %v1655
        %v1657 = vmul.f32 %v1467, %v1656
        %vm1658 = vcmp.eq.f32.partialorder %v1467, inf
        %v1659 = vsel %vm1658, %v1467, %v1657
        %vm1660 = vcmp.eq.f32.partialorder %v1467, 0.0
        %v1661 = vand.u32 %v1467, 2147483648
        %v1662 = vsel %vm1660, %v1661, %v1659
        %v1663 = vrsqrt.pop %v1468
        %v1664 = vmul.f32 %v1663, %v1468
        %v1665 = vmul.f32 %v1664, %v1663
        %v1666 = vmul.f32 0.5, %v1665
        %v1667 = vsub.f32 1.5, %v1666
        %v1668 = vmul.f32 %v1663, %v1667
        %v1669 = vmul.f32 %v1468, %v1668
        %vm1670 = vcmp.eq.f32.partialorder %v1468, inf
        %v1671 = vsel %vm1670, %v1468, %v1669
        %vm1672 = vcmp.eq.f32.partialorder %v1468, 0.0
        %v1673 = vand.u32 %v1468, 2147483648
        %v1674 = vsel %vm1672, %v1673, %v1671
        %v1675 = vrsqrt.pop %v1469
        %v1676 = vmul.f32 %v1675, %v1469
        %v1677 = vmul.f32 %v1676, %v1675
        %v1678 = vmul.f32 0.5, %v1677
        %v1679 = vsub.f32 1.5, %v1678
        %v1680 = vmul.f32 %v1675, %v1679
        %v1681 = vmul.f32 %v1469, %v1680
        %vm1682 = vcmp.eq.f32.partialorder %v1469, inf
        %v1683 = vsel %vm1682, %v1469, %v1681
        %vm1684 = vcmp.eq.f32.partialorder %v1469, 0.0
        %v1685 = vand.u32 %v1469, 2147483648
        %v1686 = vsel %vm1684, %v1685, %v1683
        %v1687 = vrsqrt.pop %v1470
        %v1688 = vmul.f32 %v1687, %v1470
        %v1689 = vmul.f32 %v1688, %v1687
        %v1690 = vmul.f32 0.5, %v1689
        %v1691 = vsub.f32 1.5, %v1690
        %v1692 = vmul.f32 %v1687, %v1691
        %v1693 = vmul.f32 %v1470, %v1692
        %vm1694 = vcmp.eq.f32.partialorder %v1470, inf
        %v1695 = vsel %vm1694, %v1470, %v1693
        %vm1696 = vcmp.eq.f32.partialorder %v1470, 0.0
        %v1697 = vand.u32 %v1470, 2147483648
        %v1698 = vsel %vm1696, %v1697, %v1695
        %v1699 = vrsqrt.pop %v1471
        %v1700 = vmul.f32 %v1699, %v1471
        %v1701 = vmul.f32 %v1700, %v1699
        %v1702 = vmul.f32 0.5, %v1701
        %v1703 = vsub.f32 1.5, %v1702
        %v1704 = vmul.f32 %v1699, %v1703
        %v1705 = vmul.f32 %v1471, %v1704
        %vm1706 = vcmp.eq.f32.partialorder %v1471, inf
        %v1707 = vsel %vm1706, %v1471, %v1705
        %vm1708 = vcmp.eq.f32.partialorder %v1471, 0.0
        %v1709 = vand.u32 %v1471, 2147483648
        %v1710 = vsel %vm1708, %v1709, %v1707
        %v1711 = vrsqrt.pop %v1472
        %v1712 = vmul.f32 %v1711, %v1472
        %v1713 = vmul.f32 %v1712, %v1711
        %v1714 = vmul.f32 0.5, %v1713
        %v1715 = vsub.f32 1.5, %v1714
        %v1716 = vmul.f32 %v1711, %v1715
        %v1717 = vmul.f32 %v1472, %v1716
        %vm1718 = vcmp.eq.f32.partialorder %v1472, inf
        %v1719 = vsel %vm1718, %v1472, %v1717
        %vm1720 = vcmp.eq.f32.partialorder %v1472, 0.0
        %v1721 = vand.u32 %v1472, 2147483648
        %v1722 = vsel %vm1720, %v1721, %v1719
        %v1723 = vrsqrt.pop %v1473
        %v1724 = vmul.f32 %v1723, %v1473
        %v1725 = vmul.f32 %v1724, %v1723
        %v1726 = vmul.f32 0.5, %v1725
        %v1727 = vsub.f32 1.5, %v1726
        %v1728 = vmul.f32 %v1723, %v1727
        %v1729 = vmul.f32 %v1473, %v1728
        %vm1730 = vcmp.eq.f32.partialorder %v1473, inf
        %v1731 = vsel %vm1730, %v1473, %v1729
        %vm1732 = vcmp.eq.f32.partialorder %v1473, 0.0
        %v1733 = vand.u32 %v1473, 2147483648
        %v1734 = vsel %vm1732, %v1733, %v1731
        %v1735 = vrsqrt.pop %v1474
        %v1736 = vmul.f32 %v1735, %v1474
        %v1737 = vmul.f32 %v1736, %v1735
        %v1738 = vmul.f32 0.5, %v1737
        %v1739 = vsub.f32 1.5, %v1738
        %v1740 = vmul.f32 %v1735, %v1739
        %v1741 = vmul.f32 %v1474, %v1740
        %vm1742 = vcmp.eq.f32.partialorder %v1474, inf
        %v1743 = vsel %vm1742, %v1474, %v1741
        %vm1744 = vcmp.eq.f32.partialorder %v1474, 0.0
        %v1745 = vand.u32 %v1474, 2147483648
        %v1746 = vsel %vm1744, %v1745, %v1743
        %v1747 = vrsqrt.pop %v1475
        %v1748 = vmul.f32 %v1747, %v1475
        %v1749 = vmul.f32 %v1748, %v1747
        %v1750 = vmul.f32 0.5, %v1749
        %v1751 = vsub.f32 1.5, %v1750
        %v1752 = vmul.f32 %v1747, %v1751
        %v1753 = vmul.f32 %v1475, %v1752
        %vm1754 = vcmp.eq.f32.partialorder %v1475, inf
        %v1755 = vsel %vm1754, %v1475, %v1753
        %vm1756 = vcmp.eq.f32.partialorder %v1475, 0.0
        %v1757 = vand.u32 %v1475, 2147483648
        %v1758 = vsel %vm1756, %v1757, %v1755
        %v1759 = vrsqrt.pop %v1476
        %v1760 = vmul.f32 %v1759, %v1476
        %v1761 = vmul.f32 %v1760, %v1759
        %v1762 = vmul.f32 0.5, %v1761
        %v1763 = vsub.f32 1.5, %v1762
        %v1764 = vmul.f32 %v1759, %v1763
        %v1765 = vmul.f32 %v1476, %v1764
        %vm1766 = vcmp.eq.f32.partialorder %v1476, inf
        %v1767 = vsel %vm1766, %v1476, %v1765
        %vm1768 = vcmp.eq.f32.partialorder %v1476, 0.0
        %v1769 = vand.u32 %v1476, 2147483648
        %v1770 = vsel %vm1768, %v1769, %v1767
        %v1771 = vrsqrt.pop %v1477
        %v1772 = vmul.f32 %v1771, %v1477
        %v1773 = vmul.f32 %v1772, %v1771
        %v1774 = vmul.f32 0.5, %v1773
        %v1775 = vsub.f32 1.5, %v1774
        %v1776 = vmul.f32 %v1771, %v1775
        %v1777 = vmul.f32 %v1477, %v1776
        %vm1778 = vcmp.eq.f32.partialorder %v1477, inf
        %v1779 = vsel %vm1778, %v1477, %v1777
        %vm1780 = vcmp.eq.f32.partialorder %v1477, 0.0
        %v1781 = vand.u32 %v1477, 2147483648
        %v1782 = vsel %vm1780, %v1781, %v1779
        %v1783 = vrsqrt.pop %v1478
        %v1784 = vmul.f32 %v1783, %v1478
        %v1785 = vmul.f32 %v1784, %v1783
        %v1786 = vmul.f32 0.5, %v1785
        %v1787 = vsub.f32 1.5, %v1786
        %v1788 = vmul.f32 %v1783, %v1787
        %v1789 = vmul.f32 %v1478, %v1788
        %vm1790 = vcmp.eq.f32.partialorder %v1478, inf
        %v1791 = vsel %vm1790, %v1478, %v1789
        %vm1792 = vcmp.eq.f32.partialorder %v1478, 0.0
        %v1793 = vand.u32 %v1478, 2147483648
        %v1794 = vsel %vm1792, %v1793, %v1791
        %v1795 = vrsqrt.pop %v1479
        %v1796 = vmul.f32 %v1795, %v1479
        %v1797 = vmul.f32 %v1796, %v1795
        %v1798 = vmul.f32 0.5, %v1797
        %v1799 = vsub.f32 1.5, %v1798
        %v1800 = vmul.f32 %v1795, %v1799
        %v1801 = vmul.f32 %v1479, %v1800
        %vm1802 = vcmp.eq.f32.partialorder %v1479, inf
        %v1803 = vsel %vm1802, %v1479, %v1801
        %vm1804 = vcmp.eq.f32.partialorder %v1479, 0.0
        %v1805 = vand.u32 %v1479, 2147483648
        %v1806 = vsel %vm1804, %v1805, %v1803
        %v1807 = vrsqrt.pop %v1480
        %v1808 = vmul.f32 %v1807, %v1480
        %v1809 = vmul.f32 %v1808, %v1807
        %v1810 = vmul.f32 0.5, %v1809
        %v1811 = vsub.f32 1.5, %v1810
        %v1812 = vmul.f32 %v1807, %v1811
        %v1813 = vmul.f32 %v1480, %v1812
        %vm1814 = vcmp.eq.f32.partialorder %v1480, inf
        %v1815 = vsel %vm1814, %v1480, %v1813
        %vm1816 = vcmp.eq.f32.partialorder %v1480, 0.0
        %v1817 = vand.u32 %v1480, 2147483648
        %v1818 = vsel %vm1816, %v1817, %v1815
        %v1819 = vrsqrt.pop %v1481
        %v1820 = vmul.f32 %v1819, %v1481
        %v1821 = vmul.f32 %v1820, %v1819
        %v1822 = vmul.f32 0.5, %v1821
        %v1823 = vsub.f32 1.5, %v1822
        %v1824 = vmul.f32 %v1819, %v1823
        %v1825 = vmul.f32 %v1481, %v1824
        %vm1826 = vcmp.eq.f32.partialorder %v1481, inf
        %v1827 = vsel %vm1826, %v1481, %v1825
        %vm1828 = vcmp.eq.f32.partialorder %v1481, 0.0
        %v1829 = vand.u32 %v1481, 2147483648
        %v1830 = vsel %vm1828, %v1829, %v1827
        %v1831 = vrsqrt.pop %v1482
        %v1832 = vmul.f32 %v1831, %v1482
        %v1833 = vmul.f32 %v1832, %v1831
        %v1834 = vmul.f32 0.5, %v1833
        %v1835 = vsub.f32 1.5, %v1834
        %v1836 = vmul.f32 %v1831, %v1835
        %v1837 = vmul.f32 %v1482, %v1836
        %vm1838 = vcmp.eq.f32.partialorder %v1482, inf
        %v1839 = vsel %vm1838, %v1482, %v1837
        %vm1840 = vcmp.eq.f32.partialorder %v1482, 0.0
        %v1841 = vand.u32 %v1482, 2147483648
        %v1842 = vsel %vm1840, %v1841, %v1839
        %v1843 = vrsqrt.pop %v1483
        %v1844 = vmul.f32 %v1843, %v1483
        %v1845 = vmul.f32 %v1844, %v1843
        %v1846 = vmul.f32 0.5, %v1845
        %v1847 = vsub.f32 1.5, %v1846
        %v1848 = vmul.f32 %v1843, %v1847
        %v1849 = vmul.f32 %v1483, %v1848
        %vm1850 = vcmp.eq.f32.partialorder %v1483, inf
        %v1851 = vsel %vm1850, %v1483, %v1849
        %vm1852 = vcmp.eq.f32.partialorder %v1483, 0.0
        %v1853 = vand.u32 %v1483, 2147483648
        %v1854 = vsel %vm1852, %v1853, %v1851
        %v1855 = vrsqrt.pop %v1484
        %v1856 = vmul.f32 %v1855, %v1484
        %v1857 = vmul.f32 %v1856, %v1855
        %v1858 = vmul.f32 0.5, %v1857
        %v1859 = vsub.f32 1.5, %v1858
        %v1860 = vmul.f32 %v1855, %v1859
        %v1861 = vmul.f32 %v1484, %v1860
        %vm1862 = vcmp.eq.f32.partialorder %v1484, inf
        %v1863 = vsel %vm1862, %v1484, %v1861
        %vm1864 = vcmp.eq.f32.partialorder %v1484, 0.0
        %v1865 = vand.u32 %v1484, 2147483648
        %v1866 = vsel %vm1864, %v1865, %v1863
        %v1867 = vrsqrt.pop %v1485
        %v1868 = vmul.f32 %v1867, %v1485
        %v1869 = vmul.f32 %v1868, %v1867
        %v1870 = vmul.f32 0.5, %v1869
        %v1871 = vsub.f32 1.5, %v1870
        %v1872 = vmul.f32 %v1867, %v1871
        %v1873 = vmul.f32 %v1485, %v1872
        %vm1874 = vcmp.eq.f32.partialorder %v1485, inf
        %v1875 = vsel %vm1874, %v1485, %v1873
        %vm1876 = vcmp.eq.f32.partialorder %v1485, 0.0
        %v1877 = vand.u32 %v1485, 2147483648
        %v1878 = vsel %vm1876, %v1877, %v1875
        %v1879 = vrsqrt.pop %v1486
        %v1880 = vmul.f32 %v1879, %v1486
        %v1881 = vmul.f32 %v1880, %v1879
        %v1882 = vmul.f32 0.5, %v1881
        %v1883 = vsub.f32 1.5, %v1882
        %v1884 = vmul.f32 %v1879, %v1883
        %v1885 = vmul.f32 %v1486, %v1884
        %vm1886 = vcmp.eq.f32.partialorder %v1486, inf
        %v1887 = vsel %vm1886, %v1486, %v1885
        %vm1888 = vcmp.eq.f32.partialorder %v1486, 0.0
        %v1889 = vand.u32 %v1486, 2147483648
        %v1890 = vsel %vm1888, %v1889, %v1887
        %v1891 = vrsqrt.pop %v1487
        %v1892 = vmul.f32 %v1891, %v1487
        %v1893 = vmul.f32 %v1892, %v1891
        %v1894 = vmul.f32 0.5, %v1893
        %v1895 = vsub.f32 1.5, %v1894
        %v1896 = vmul.f32 %v1891, %v1895
        %v1897 = vmul.f32 %v1487, %v1896
        %vm1898 = vcmp.eq.f32.partialorder %v1487, inf
        %v1899 = vsel %vm1898, %v1487, %v1897
        %vm1900 = vcmp.eq.f32.partialorder %v1487, 0.0
        %v1901 = vand.u32 %v1487, 2147483648
        %v1902 = vsel %vm1900, %v1901, %v1899
        %v1903 = vrsqrt.pop %v1488
        %v1904 = vmul.f32 %v1903, %v1488
        %v1905 = vmul.f32 %v1904, %v1903
        %v1906 = vmul.f32 0.5, %v1905
        %v1907 = vsub.f32 1.5, %v1906
        %v1908 = vmul.f32 %v1903, %v1907
        %v1909 = vmul.f32 %v1488, %v1908
        %vm1910 = vcmp.eq.f32.partialorder %v1488, inf
        %v1911 = vsel %vm1910, %v1488, %v1909
        %vm1912 = vcmp.eq.f32.partialorder %v1488, 0.0
        %v1913 = vand.u32 %v1488, 2147483648
        %v1914 = vsel %vm1912, %v1913, %v1911
        %v1915 = vstv %s1626
        %v1916 = vmul.f32 %v1638, %v1915
        %v1917 = vmul.f32 %v1650, %v1915
        %v1918 = vmul.f32 %v1662, %v1915
        %v1919 = vmul.f32 %v1674, %v1915
        %v1920 = vmul.f32 %v1686, %v1915
        %v1921 = vmul.f32 %v1698, %v1915
        %v1922 = vmul.f32 %v1710, %v1915
        %v1923 = vmul.f32 %v1722, %v1915
        %v1924 = vmul.f32 %v1734, %v1915
        %v1925 = vmul.f32 %v1746, %v1915
        %v1926 = vmul.f32 %v1758, %v1915
        %v1927 = vmul.f32 %v1770, %v1915
        %v1928 = vmul.f32 %v1782, %v1915
        %v1929 = vmul.f32 %v1794, %v1915
        %v1930 = vmul.f32 %v1806, %v1915
        %v1931 = vmul.f32 %v1818, %v1915
        %v1932 = vmul.f32 %v1830, %v1915
        %v1933 = vmul.f32 %v1842, %v1915
        %v1934 = vmul.f32 %v1854, %v1915
        %v1935 = vmul.f32 %v1866, %v1915
        %v1936 = vmul.f32 %v1878, %v1915
        %v1937 = vmul.f32 %v1890, %v1915
        %v1938 = vmul.f32 %v1902, %v1915
        %v1939 = vmul.f32 %v1914, %v1915
        %v1940 = vrsqrt.pop %v1441
        %v1941 = vmul.f32 %v1940, %v1441
        %v1942 = vmul.f32 %v1941, %v1940
        %v1943 = vmul.f32 0.5, %v1942
        %v1944 = vsub.f32 1.5, %v1943
        %v1945 = vmul.f32 %v1940, %v1944
        %v1946 = vmul.f32 %v1441, %v1945
        %vm1947 = vcmp.eq.f32.partialorder %v1441, inf
        %v1948 = vsel %vm1947, %v1441, %v1946
        %vm1949 = vcmp.eq.f32.partialorder %v1441, 0.0
        %v1950 = vand.u32 %v1441, 2147483648
        %v1951 = vsel %vm1949, %v1950, %v1948
        %v1952 = vrsqrt.pop %v1442
        %v1953 = vmul.f32 %v1952, %v1442
        %v1954 = vmul.f32 %v1953, %v1952
        %v1955 = vmul.f32 0.5, %v1954
        %v1956 = vsub.f32 1.5, %v1955
        %v1957 = vmul.f32 %v1952, %v1956
        %v1958 = vmul.f32 %v1442, %v1957
        %vm1959 = vcmp.eq.f32.partialorder %v1442, inf
        %v1960 = vsel %vm1959, %v1442, %v1958
        %vm1961 = vcmp.eq.f32.partialorder %v1442, 0.0
        %v1962 = vand.u32 %v1442, 2147483648
        %v1963 = vsel %vm1961, %v1962, %v1960
        %v1964 = vrsqrt.pop %v1443
        %v1965 = vmul.f32 %v1964, %v1443
        %v1966 = vmul.f32 %v1965, %v1964
        %v1967 = vmul.f32 0.5, %v1966
        %v1968 = vsub.f32 1.5, %v1967
        %v1969 = vmul.f32 %v1964, %v1968
        %v1970 = vmul.f32 %v1443, %v1969
        %vm1971 = vcmp.eq.f32.partialorder %v1443, inf
        %v1972 = vsel %vm1971, %v1443, %v1970
        %vm1973 = vcmp.eq.f32.partialorder %v1443, 0.0
        %v1974 = vand.u32 %v1443, 2147483648
        %v1975 = vsel %vm1973, %v1974, %v1972
        %v1976 = vrsqrt.pop %v1444
        %v1977 = vmul.f32 %v1976, %v1444
        %v1978 = vmul.f32 %v1977, %v1976
        %v1979 = vmul.f32 0.5, %v1978
        %v1980 = vsub.f32 1.5, %v1979
        %v1981 = vmul.f32 %v1976, %v1980
        %v1982 = vmul.f32 %v1444, %v1981
        %vm1983 = vcmp.eq.f32.partialorder %v1444, inf
        %v1984 = vsel %vm1983, %v1444, %v1982
        %vm1985 = vcmp.eq.f32.partialorder %v1444, 0.0
        %v1986 = vand.u32 %v1444, 2147483648
        %v1987 = vsel %vm1985, %v1986, %v1984
        %v1988 = vrsqrt.pop %v1445
        %v1989 = vmul.f32 %v1988, %v1445
        %v1990 = vmul.f32 %v1989, %v1988
        %v1991 = vmul.f32 0.5, %v1990
        %v1992 = vsub.f32 1.5, %v1991
        %v1993 = vmul.f32 %v1988, %v1992
        %v1994 = vmul.f32 %v1445, %v1993
        %vm1995 = vcmp.eq.f32.partialorder %v1445, inf
        %v1996 = vsel %vm1995, %v1445, %v1994
        %vm1997 = vcmp.eq.f32.partialorder %v1445, 0.0
        %v1998 = vand.u32 %v1445, 2147483648
        %v1999 = vsel %vm1997, %v1998, %v1996
        %v2000 = vrsqrt.pop %v1446
        %v2001 = vmul.f32 %v2000, %v1446
        %v2002 = vmul.f32 %v2001, %v2000
        %v2003 = vmul.f32 0.5, %v2002
        %v2004 = vsub.f32 1.5, %v2003
        %v2005 = vmul.f32 %v2000, %v2004
        %v2006 = vmul.f32 %v1446, %v2005
        %vm2007 = vcmp.eq.f32.partialorder %v1446, inf
        %v2008 = vsel %vm2007, %v1446, %v2006
        %vm2009 = vcmp.eq.f32.partialorder %v1446, 0.0
        %v2010 = vand.u32 %v1446, 2147483648
        %v2011 = vsel %vm2009, %v2010, %v2008
        %v2012 = vrsqrt.pop %v1447
        %v2013 = vmul.f32 %v2012, %v1447
        %v2014 = vmul.f32 %v2013, %v2012
        %v2015 = vmul.f32 0.5, %v2014
        %v2016 = vsub.f32 1.5, %v2015
        %v2017 = vmul.f32 %v2012, %v2016
        %v2018 = vmul.f32 %v1447, %v2017
        %vm2019 = vcmp.eq.f32.partialorder %v1447, inf
        %v2020 = vsel %vm2019, %v1447, %v2018
        %vm2021 = vcmp.eq.f32.partialorder %v1447, 0.0
        %v2022 = vand.u32 %v1447, 2147483648
        %v2023 = vsel %vm2021, %v2022, %v2020
        %v2024 = vrsqrt.pop %v1448
        %v2025 = vmul.f32 %v2024, %v1448
        %v2026 = vmul.f32 %v2025, %v2024
        %v2027 = vmul.f32 0.5, %v2026
        %v2028 = vsub.f32 1.5, %v2027
        %v2029 = vmul.f32 %v2024, %v2028
        %v2030 = vmul.f32 %v1448, %v2029
        %vm2031 = vcmp.eq.f32.partialorder %v1448, inf
        %v2032 = vsel %vm2031, %v1448, %v2030
        %vm2033 = vcmp.eq.f32.partialorder %v1448, 0.0
        %v2034 = vand.u32 %v1448, 2147483648
        %v2035 = vsel %vm2033, %v2034, %v2032
        %v2036 = vrsqrt.pop %v1449
        %v2037 = vmul.f32 %v2036, %v1449
        %v2038 = vmul.f32 %v2037, %v2036
        %v2039 = vmul.f32 0.5, %v2038
        %v2040 = vsub.f32 1.5, %v2039
        %v2041 = vmul.f32 %v2036, %v2040
        %v2042 = vmul.f32 %v1449, %v2041
        %vm2043 = vcmp.eq.f32.partialorder %v1449, inf
        %v2044 = vsel %vm2043, %v1449, %v2042
        %vm2045 = vcmp.eq.f32.partialorder %v1449, 0.0
        %v2046 = vand.u32 %v1449, 2147483648
        %v2047 = vsel %vm2045, %v2046, %v2044
        %v2048 = vrsqrt.pop %v1450
        %v2049 = vmul.f32 %v2048, %v1450
        %v2050 = vmul.f32 %v2049, %v2048
        %v2051 = vmul.f32 0.5, %v2050
        %v2052 = vsub.f32 1.5, %v2051
        %v2053 = vmul.f32 %v2048, %v2052
        %v2054 = vmul.f32 %v1450, %v2053
        %vm2055 = vcmp.eq.f32.partialorder %v1450, inf
        %v2056 = vsel %vm2055, %v1450, %v2054
        %vm2057 = vcmp.eq.f32.partialorder %v1450, 0.0
        %v2058 = vand.u32 %v1450, 2147483648
        %v2059 = vsel %vm2057, %v2058, %v2056
        %v2060 = vrsqrt.pop %v1451
        %v2061 = vmul.f32 %v2060, %v1451
        %v2062 = vmul.f32 %v2061, %v2060
        %v2063 = vmul.f32 0.5, %v2062
        %v2064 = vsub.f32 1.5, %v2063
        %v2065 = vmul.f32 %v2060, %v2064
        %v2066 = vmul.f32 %v1451, %v2065
        %vm2067 = vcmp.eq.f32.partialorder %v1451, inf
        %v2068 = vsel %vm2067, %v1451, %v2066
        %vm2069 = vcmp.eq.f32.partialorder %v1451, 0.0
        %v2070 = vand.u32 %v1451, 2147483648
        %v2071 = vsel %vm2069, %v2070, %v2068
        %v2072 = vrsqrt.pop %v1452
        %v2073 = vmul.f32 %v2072, %v1452
        %v2074 = vmul.f32 %v2073, %v2072
        %v2075 = vmul.f32 0.5, %v2074
        %v2076 = vsub.f32 1.5, %v2075
        %v2077 = vmul.f32 %v2072, %v2076
        %v2078 = vmul.f32 %v1452, %v2077
        %vm2079 = vcmp.eq.f32.partialorder %v1452, inf
        %v2080 = vsel %vm2079, %v1452, %v2078
        %vm2081 = vcmp.eq.f32.partialorder %v1452, 0.0
        %v2082 = vand.u32 %v1452, 2147483648
        %v2083 = vsel %vm2081, %v2082, %v2080
        %v2084 = vrsqrt.pop %v1453
        %v2085 = vmul.f32 %v2084, %v1453
        %v2086 = vmul.f32 %v2085, %v2084
        %v2087 = vmul.f32 0.5, %v2086
        %v2088 = vsub.f32 1.5, %v2087
        %v2089 = vmul.f32 %v2084, %v2088
        %v2090 = vmul.f32 %v1453, %v2089
        %vm2091 = vcmp.eq.f32.partialorder %v1453, inf
        %v2092 = vsel %vm2091, %v1453, %v2090
        %vm2093 = vcmp.eq.f32.partialorder %v1453, 0.0
        %v2094 = vand.u32 %v1453, 2147483648
        %v2095 = vsel %vm2093, %v2094, %v2092
        %v2096 = vrsqrt.pop %v1454
        %v2097 = vmul.f32 %v2096, %v1454
        %v2098 = vmul.f32 %v2097, %v2096
        %v2099 = vmul.f32 0.5, %v2098
        %v2100 = vsub.f32 1.5, %v2099
        %v2101 = vmul.f32 %v2096, %v2100
        %v2102 = vmul.f32 %v1454, %v2101
        %vm2103 = vcmp.eq.f32.partialorder %v1454, inf
        %v2104 = vsel %vm2103, %v1454, %v2102
        %vm2105 = vcmp.eq.f32.partialorder %v1454, 0.0
        %v2106 = vand.u32 %v1454, 2147483648
        %v2107 = vsel %vm2105, %v2106, %v2104
        %v2108 = vrsqrt.pop %v1455
        %v2109 = vmul.f32 %v2108, %v1455
        %v2110 = vmul.f32 %v2109, %v2108
        %v2111 = vmul.f32 0.5, %v2110
        %v2112 = vsub.f32 1.5, %v2111
        %v2113 = vmul.f32 %v2108, %v2112
        %v2114 = vmul.f32 %v1455, %v2113
        %vm2115 = vcmp.eq.f32.partialorder %v1455, inf
        %v2116 = vsel %vm2115, %v1455, %v2114
        %vm2117 = vcmp.eq.f32.partialorder %v1455, 0.0
        %v2118 = vand.u32 %v1455, 2147483648
        %v2119 = vsel %vm2117, %v2118, %v2116
        %v2120 = vrsqrt.pop %v1456
        %v2121 = vmul.f32 %v2120, %v1456
        %v2122 = vmul.f32 %v2121, %v2120
        %v2123 = vmul.f32 0.5, %v2122
        %v2124 = vsub.f32 1.5, %v2123
        %v2125 = vmul.f32 %v2120, %v2124
        %v2126 = vmul.f32 %v1456, %v2125
        %vm2127 = vcmp.eq.f32.partialorder %v1456, inf
        %v2128 = vsel %vm2127, %v1456, %v2126
        %vm2129 = vcmp.eq.f32.partialorder %v1456, 0.0
        %v2130 = vand.u32 %v1456, 2147483648
        %v2131 = vsel %vm2129, %v2130, %v2128
        %v2132 = vrsqrt.pop %v1457
        %v2133 = vmul.f32 %v2132, %v1457
        %v2134 = vmul.f32 %v2133, %v2132
        %v2135 = vmul.f32 0.5, %v2134
        %v2136 = vsub.f32 1.5, %v2135
        %v2137 = vmul.f32 %v2132, %v2136
        %v2138 = vmul.f32 %v1457, %v2137
        %vm2139 = vcmp.eq.f32.partialorder %v1457, inf
        %v2140 = vsel %vm2139, %v1457, %v2138
        %vm2141 = vcmp.eq.f32.partialorder %v1457, 0.0
        %v2142 = vand.u32 %v1457, 2147483648
        %v2143 = vsel %vm2141, %v2142, %v2140
        %v2144 = vrsqrt.pop %v1458
        %v2145 = vmul.f32 %v2144, %v1458
        %v2146 = vmul.f32 %v2145, %v2144
        %v2147 = vmul.f32 0.5, %v2146
        %v2148 = vsub.f32 1.5, %v2147
        %v2149 = vmul.f32 %v2144, %v2148
        %v2150 = vmul.f32 %v1458, %v2149
        %vm2151 = vcmp.eq.f32.partialorder %v1458, inf
        %v2152 = vsel %vm2151, %v1458, %v2150
        %vm2153 = vcmp.eq.f32.partialorder %v1458, 0.0
        %v2154 = vand.u32 %v1458, 2147483648
        %v2155 = vsel %vm2153, %v2154, %v2152
        %v2156 = vrsqrt.pop %v1459
        %v2157 = vmul.f32 %v2156, %v1459
        %v2158 = vmul.f32 %v2157, %v2156
        %v2159 = vmul.f32 0.5, %v2158
        %v2160 = vsub.f32 1.5, %v2159
        %v2161 = vmul.f32 %v2156, %v2160
        %v2162 = vmul.f32 %v1459, %v2161
        %vm2163 = vcmp.eq.f32.partialorder %v1459, inf
        %v2164 = vsel %vm2163, %v1459, %v2162
        %vm2165 = vcmp.eq.f32.partialorder %v1459, 0.0
        %v2166 = vand.u32 %v1459, 2147483648
        %v2167 = vsel %vm2165, %v2166, %v2164
        %v2168 = vrsqrt.pop %v1460
        %v2169 = vmul.f32 %v2168, %v1460
        %v2170 = vmul.f32 %v2169, %v2168
        %v2171 = vmul.f32 0.5, %v2170
        %v2172 = vsub.f32 1.5, %v2171
        %v2173 = vmul.f32 %v2168, %v2172
        %v2174 = vmul.f32 %v1460, %v2173
        %vm2175 = vcmp.eq.f32.partialorder %v1460, inf
        %v2176 = vsel %vm2175, %v1460, %v2174
        %vm2177 = vcmp.eq.f32.partialorder %v1460, 0.0
        %v2178 = vand.u32 %v1460, 2147483648
        %v2179 = vsel %vm2177, %v2178, %v2176
        %v2180 = vrsqrt.pop %v1461
        %v2181 = vmul.f32 %v2180, %v1461
        %v2182 = vmul.f32 %v2181, %v2180
        %v2183 = vmul.f32 0.5, %v2182
        %v2184 = vsub.f32 1.5, %v2183
        %v2185 = vmul.f32 %v2180, %v2184
        %v2186 = vmul.f32 %v1461, %v2185
        %vm2187 = vcmp.eq.f32.partialorder %v1461, inf
        %v2188 = vsel %vm2187, %v1461, %v2186
        %vm2189 = vcmp.eq.f32.partialorder %v1461, 0.0
        %v2190 = vand.u32 %v1461, 2147483648
        %v2191 = vsel %vm2189, %v2190, %v2188
        %v2192 = vrsqrt.pop %v1462
        %v2193 = vmul.f32 %v2192, %v1462
        %v2194 = vmul.f32 %v2193, %v2192
        %v2195 = vmul.f32 0.5, %v2194
        %v2196 = vsub.f32 1.5, %v2195
        %v2197 = vmul.f32 %v2192, %v2196
        %v2198 = vmul.f32 %v1462, %v2197
        %vm2199 = vcmp.eq.f32.partialorder %v1462, inf
        %v2200 = vsel %vm2199, %v1462, %v2198
        %vm2201 = vcmp.eq.f32.partialorder %v1462, 0.0
        %v2202 = vand.u32 %v1462, 2147483648
        %v2203 = vsel %vm2201, %v2202, %v2200
        %v2204 = vrsqrt.pop %v1463
        %v2205 = vmul.f32 %v2204, %v1463
        %v2206 = vmul.f32 %v2205, %v2204
        %v2207 = vmul.f32 0.5, %v2206
        %v2208 = vsub.f32 1.5, %v2207
        %v2209 = vmul.f32 %v2204, %v2208
        %v2210 = vmul.f32 %v1463, %v2209
        %vm2211 = vcmp.eq.f32.partialorder %v1463, inf
        %v2212 = vsel %vm2211, %v1463, %v2210
        %vm2213 = vcmp.eq.f32.partialorder %v1463, 0.0
        %v2214 = vand.u32 %v1463, 2147483648
        %v2215 = vsel %vm2213, %v2214, %v2212
        %v2216 = vrsqrt.pop %v1464
        %v2217 = vmul.f32 %v2216, %v1464
        %v2218 = vmul.f32 %v2217, %v2216
        %v2219 = vmul.f32 0.5, %v2218
        %v2220 = vsub.f32 1.5, %v2219
        %v2221 = vmul.f32 %v2216, %v2220
        %v2222 = vmul.f32 %v1464, %v2221
        %vm2223 = vcmp.eq.f32.partialorder %v1464, inf
        %v2224 = vsel %vm2223, %v1464, %v2222
        %vm2225 = vcmp.eq.f32.partialorder %v1464, 0.0
        %v2226 = vand.u32 %v1464, 2147483648
        %v2227 = vsel %vm2225, %v2226, %v2224
        %v2228 = vstv %s1557
        %v2229 = vmul.f32 %v1951, %v2228
        %v2230 = vmul.f32 %v1963, %v2228
        %v2231 = vmul.f32 %v1975, %v2228
        %v2232 = vmul.f32 %v1987, %v2228
        %v2233 = vmul.f32 %v1999, %v2228
        %v2234 = vmul.f32 %v2011, %v2228
        %v2235 = vmul.f32 %v2023, %v2228
        %v2236 = vmul.f32 %v2035, %v2228
        %v2237 = vmul.f32 %v2047, %v2228
        %v2238 = vmul.f32 %v2059, %v2228
        %v2239 = vmul.f32 %v2071, %v2228
        %v2240 = vmul.f32 %v2083, %v2228
        %v2241 = vmul.f32 %v2095, %v2228
        %v2242 = vmul.f32 %v2107, %v2228
        %v2243 = vmul.f32 %v2119, %v2228
        %v2244 = vmul.f32 %v2131, %v2228
        %v2245 = vmul.f32 %v2143, %v2228
        %v2246 = vmul.f32 %v2155, %v2228
        %v2247 = vmul.f32 %v2167, %v2228
        %v2248 = vmul.f32 %v2179, %v2228
        %v2249 = vmul.f32 %v2191, %v2228
        %v2250 = vmul.f32 %v2203, %v2228
        %v2251 = vmul.f32 %v2215, %v2228
        %v2252 = vmul.f32 %v2227, %v2228
        %v2253 = vsub.f32 %v1916, %v2229
        %v2254 = vsub.f32 %v1917, %v2230
        %v2255 = vsub.f32 %v1918, %v2231
        %v2256 = vsub.f32 %v1919, %v2232
        %v2257 = vsub.f32 %v1920, %v2233
        %v2258 = vsub.f32 %v1921, %v2234
        %v2259 = vsub.f32 %v1922, %v2235
        %v2260 = vsub.f32 %v1923, %v2236
        %v2261 = vsub.f32 %v1924, %v2237
        %v2262 = vsub.f32 %v1925, %v2238
        %v2263 = vsub.f32 %v1926, %v2239
        %v2264 = vsub.f32 %v1927, %v2240
        %v2265 = vsub.f32 %v1928, %v2241
        %v2266 = vsub.f32 %v1929, %v2242
        %v2267 = vsub.f32 %v1930, %v2243
        %v2268 = vsub.f32 %v1931, %v2244
        %v2269 = vsub.f32 %v1932, %v2245
        %v2270 = vsub.f32 %v1933, %v2246
        %v2271 = vsub.f32 %v1934, %v2247
        %v2272 = vsub.f32 %v1935, %v2248
        %v2273 = vsub.f32 %v1936, %v2249
        %v2274 = vsub.f32 %v1937, %v2250
        %v2275 = vsub.f32 %v1938, %v2251
        %v2276 = vsub.f32 %v1939, %v2252
        %v2277 = vmul.f32 %v2253, %v2253
        %v2278 = vmul.f32 %v2254, %v2254
        %v2279 = vmul.f32 %v2255, %v2255
        %v2280 = vmul.f32 %v2256, %v2256
        %v2281 = vmul.f32 %v2257, %v2257
        %v2282 = vmul.f32 %v2258, %v2258
        %v2283 = vmul.f32 %v2259, %v2259
        %v2284 = vmul.f32 %v2260, %v2260
        %v2285 = vmul.f32 %v2261, %v2261
        %v2286 = vmul.f32 %v2262, %v2262
        %v2287 = vmul.f32 %v2263, %v2263
        %v2288 = vmul.f32 %v2264, %v2264
        %v2289 = vmul.f32 %v2265, %v2265
        %v2290 = vmul.f32 %v2266, %v2266
        %v2291 = vmul.f32 %v2267, %v2267
        %v2292 = vmul.f32 %v2268, %v2268
        %v2293 = vmul.f32 %v2269, %v2269
        %v2294 = vmul.f32 %v2270, %v2270
        %v2295 = vmul.f32 %v2271, %v2271
        %v2296 = vmul.f32 %v2272, %v2272
        %v2297 = vmul.f32 %v2273, %v2273
        %v2298 = vmul.f32 %v2274, %v2274
        %v2299 = vmul.f32 %v2275, %v2275
        %v2300 = vmul.f32 %v2276, %v2276
        %v2301 = vsel %vm810, %v2277, 0.0
        %v2302 = vsel %vm810, %v2278, 0.0
        %v2303 = vadd.f32 %v2301, %v2302
        %v2304 = vsel %vm810, %v2279, 0.0
        %v2305 = vadd.f32 %v2303, %v2304
        %v2306 = vsel %vm810, %v2280, 0.0
        %v2307 = vadd.f32 %v2305, %v2306
        %v2308 = vsel %vm810, %v2281, 0.0
        %v2309 = vadd.f32 %v2307, %v2308
        %v2310 = vsel %vm810, %v2282, 0.0
        %v2311 = vadd.f32 %v2309, %v2310
        %v2312 = vsel %vm810, %v2283, 0.0
        %v2313 = vadd.f32 %v2311, %v2312
        %v2314 = vsel %vm810, %v2284, 0.0
        %v2315 = vadd.f32 %v2313, %v2314
        %v2316 = vsel %vm810, %v2285, 0.0
        %v2317 = vadd.f32 %v2315, %v2316
        %v2318 = vsel %vm810, %v2286, 0.0
        %v2319 = vadd.f32 %v2317, %v2318
        %v2320 = vsel %vm810, %v2287, 0.0
        %v2321 = vadd.f32 %v2319, %v2320
        %v2322 = vsel %vm810, %v2288, 0.0
        %v2323 = vadd.f32 %v2321, %v2322
        %v2324 = vsel %vm810, %v2289, 0.0
        %v2325 = vadd.f32 %v2323, %v2324
        %v2326 = vsel %vm810, %v2290, 0.0
        %v2327 = vadd.f32 %v2325, %v2326
        %v2328 = vsel %vm810, %v2291, 0.0
        %v2329 = vadd.f32 %v2327, %v2328
        %v2330 = vsel %vm810, %v2292, 0.0
        %v2331 = vadd.f32 %v2329, %v2330
        %v2332 = vsel %vm810, %v2293, 0.0
        %v2333 = vadd.f32 %v2331, %v2332
        %v2334 = vsel %vm810, %v2294, 0.0
        %v2335 = vadd.f32 %v2333, %v2334
        %v2336 = vsel %vm810, %v2295, 0.0
        %v2337 = vadd.f32 %v2335, %v2336
        %v2338 = vsel %vm810, %v2296, 0.0
        %v2339 = vadd.f32 %v2337, %v2338
        %v2340 = vsel %vm810, %v2297, 0.0
        %v2341 = vadd.f32 %v2339, %v2340
        %v2342 = vsel %vm810, %v2298, 0.0
        %v2343 = vadd.f32 %v2341, %v2342
        %v2344 = vsel %vm810, %v2299, 0.0
        %v2345 = vadd.f32 %v2343, %v2344
        %v2346 = vsel %vm810, %v2300, 0.0
        %v2347 = vadd.f32 %v2345, %v2346
        %2348 = vadd.xlane.f32.xlu0 %v2347
        %v2349 = vpop.xlane.xlu0 %2348
        %v2350 = vrot.slane %v2349, 4
        %v2351 = vadd.f32 %v2349, %v2350
        %v2352 = vrot.slane %v2351, 2
        %v2353 = vadd.f32 %v2351, %v2352
        %v2354 = vrot.slane %v2353, 1
        %v2355 = vadd.f32 %v2353, %v2354
        %s2356 = vtos %v2355
        %v2357 = vstv %s2356
        %vm2358 = vcmask 0
        %2359 = vst.msk [vmem:[%s203] sm:$0x1] %vm2358, %v2357
      $region36: #{tpu_custom_call.1} parent=27 // pred_fallthru
        _
      %p2360 = scmp.lt.s32.totalorder %s17, 1
      %s2361 = scalar_select %p2360, %s17, 1
      %s2362 = scalar_lea.vmem %s2, %s2361
      // Predicated region
      $region37: #{tpu_custom_call.1} parent=27 // pred_check
        %p2363 = pneg %p99
      $region38: #{tpu_custom_call.1} parent=27 // pred_check_branch
        %2365 = sbr.rel (%p2363) target = $region40
      $region39: #{tpu_custom_call.1} parent=27 // pred_region
        _
      $region40: #{tpu_custom_call.1} parent=27 // pred_fallthru
        _
    $region28: #{tpu_custom_call.1} parent=5 // pred_fallthru
      _
    %p2366 = scmp.le.s32.totalorder 2, %s8
    // Predicated region
    $region41: #{tpu_custom_call.1} parent=5 // pred_check
      %p2367 = pneg %p2366
    $region42: #{tpu_custom_call.1} parent=5 // pred_check_branch
      %2369 = sbr.rel (%p2367) target = $region44
    $region43: #{tpu_custom_call.1} parent=5 // pred_region
      %s2370 = ssub.s32 %s8, 2
      // Predicated region
      $region45: #{tpu_custom_call.1} parent=43 // pred_check
        %p2371 = pneg %p105
      $region46: #{tpu_custom_call.1} parent=43 // pred_check_branch
        %2373 = sbr.rel (%p2371) target = $region48
      $region47: #{tpu_custom_call.1} parent=43 // pred_region
        %p2374 = scmp.lt.s32.totalorder %s19, 1
        %s2375 = scalar_select %p2374, %s19, 1
        %s2376 = scalar_lea.vmem %s2, %s2375
      $region48: #{tpu_custom_call.1} parent=43 // pred_fallthru
        _
    $region44: #{tpu_custom_call.1} parent=5 // pred_fallthru
      _
  $region6: #{tpu_custom_call.1} parent=0 // loop_footer
    %s12 = sadd.s32 1, %s8
  $region7: #{tpu_custom_call.1} parent=0 // loop_footer_branch
    %7 = sbr.rel target = $region3
  $region8: #{tpu_custom_call.1} parent=0 // loop_exit
    _

</llo_original>
